<compile_context>
chip_gen: v5e
topology: v5e:2x2
jax: 0.10.0
libtpu: 0.0.40
codegen_flags: <defaults>
</compile_context>

<pallas_src>
import functools

import jax
import jax.numpy as jnp
from jax.experimental import pallas as pl
from jax.experimental.pallas import tpu as pltpu


def lightconvnet_kernel(x_ref, wf_ref, sh_ref, s_ref, st_ref, wct_ref, g_ref,
                        wcls_ref, bcls_ref, out_ref, *, win_len, b_tile):
    # --- spacial_block: Conv2d(n_bands, E, (n_channels, 1)) with bias + BatchNorm
    #     folded into one bf16 MXU matmul over the collapsed (band, channel) dim.
    z = jnp.dot(wf_ref[...], x_ref[...],
                preferred_element_type=jnp.float32)          # (E, B_TILE*T), f32
    z = z + sh_ref[...]                                      # folded bias/BN shift (E,1)
    # ELU(alpha=1); min() keeps the unselected exp branch finite.
    z = jnp.where(z > 0, z, jnp.exp(jnp.minimum(z, 0.0)) - 1.0)

    # --- temporal_block (LogVarLayer): per-window unbiased variance via two-pass
    #     matmuls against the constant block-diagonal window selector S.
    sel = s_ref[...]                                         # (B_TILE*T, B_TILE*n_win)
    mu = jnp.dot(z, sel, preferred_element_type=jnp.float32) * (1.0 / win_len)
    mu_b = jnp.dot(mu, st_ref[...], preferred_element_type=jnp.float32)   # (E, B_TILE*T)
    d = z - mu_b
    ssd = jnp.dot(d * d, sel, preferred_element_type=jnp.float32)         # (E, B_TILE*n_win)
    lv = jnp.log(jnp.clip(ssd * (1.0 / (win_len - 1)), 1e-6, 1e6))

    # --- LightweightConv1d (softmaxed head weights, kernel spans all windows):
    #     per-channel weighted sum over windows, folded per batch element with G.
    y = jnp.dot(lv * wct_ref[...], g_ref[...],
                preferred_element_type=jnp.float32)          # (E, B_TILE)

    # --- classify: Linear(E, n_classes) + LogSoftmax over the real classes.
    #     Padded class lanes carry a -1e30 bias so they vanish under softmax.
    wcls = wcls_ref[...]                                     # (E, n_cls_pad)
    bcls = bcls_ref[...]                                     # (1, n_cls_pad)
    for b in range(b_tile):                                  # static, small
        row = jnp.sum(y[:, b:b + 1] * wcls, axis=0, keepdims=True) + bcls  # (1, n_cls_pad)
        m = jnp.max(row, axis=-1, keepdims=True)
        lse = m + jnp.log(jnp.sum(jnp.exp(row - m), axis=-1, keepdims=True))
        out_ref[pl.ds(b, 1), :] = row - lse


def lightconvnet_forward(x, params, *, win_len, b_tile=8):
    B, F, Ch, T = x.shape
    E = params["w_spatial"].shape[0]
    FC = F * Ch
    assert T % win_len == 0, "n_samples must be a multiple of win_len"
    n_win = T // win_len
    n_cls = params["w_cls"].shape[1]
    n_cls_pad = ((n_cls + 127) // 128) * 128

    # Batch tiling: pad B up to a multiple of b_tile; fall back to one full-batch
    # block if the tiles would not be (8,128)-aligned for the TPU layout.
    b_tile = min(b_tile, B)
    B_pad = -(-B // b_tile) * b_tile
    if b_tile != B_pad and ((b_tile * T) % 128 != 0 or b_tile % 8 != 0):
        b_tile = B_pad = B
    grid = B_pad // b_tile

    # Fold conv bias + eval-mode BatchNorm into the spatial conv weight.
    w_fused = (params["bn_scale"] * params["w_spatial"]).astype(jnp.bfloat16)         # (E, FC)
    shift = (params["bn_scale"] * params["b_spatial"]
             + params["bn_shift"]).astype(jnp.float32)                                # (E, 1)

    # x: (B, F, Ch, T) -> (FC, B_pad*T) bf16, so the spatial conv is a single
    # lane-dense matmul with B_TILE*T as the MXU N dimension.
    x2 = x.reshape(B, FC, T)
    if B_pad != B:
        x2 = jnp.pad(x2, ((0, B_pad - B), (0, 0), (0, 0)))
    xk = jnp.transpose(x2, (1, 0, 2)).reshape(FC, B_pad * T).astype(jnp.bfloat16)

    # Block-diagonal window selector for one batch tile:
    # S[b*T + t, b*n_win + w] = 1 iff t lies in window w of batch b.
    row = jnp.arange(b_tile * T)
    col = jnp.arange(b_tile * n_win)
    same_batch = (row[:, None] // T) == (col[None, :] // n_win)
    same_win = ((row[:, None] % T) // win_len) == (col[None, :] % n_win)
    sel = (same_batch & same_win).astype(jnp.float32)        # (b_tile*T, b_tile*n_win)
    sel_t = sel.T                                            # (b_tile*n_win, b_tile*T)
    # G sums the n_win window columns belonging to each batch element.
    gmat = ((col[:, None] // n_win)
            == jnp.arange(b_tile)[None, :]).astype(jnp.float32)   # (b_tile*n_win, b_tile)

    # LightweightConv1d per-channel softmaxed weights, tiled per batch element.
    wct = jnp.tile(params["w_conv_per_ch"], (1, b_tile)).astype(jnp.float32)  # (E, b_tile*n_win)

    # Classifier, padded to a lane-dense 128-wide output (sliced off outside).
    w_cls_pad = jnp.zeros((E, n_cls_pad), jnp.float32).at[:, :n_cls].set(params["w_cls"])
    b_cls_pad = jnp.full((1, n_cls_pad), -1e30, jnp.float32).at[:, :n_cls].set(params["b_cls"])

    kernel = functools.partial(lightconvnet_kernel, win_len=win_len, b_tile=b_tile)
    const = lambda b: (0, 0)     # parameter blocks never change -> fetched once
    out = pl.pallas_call(
        kernel,
        out_shape=jax.ShapeDtypeStruct((B_pad, n_cls_pad), jnp.float32),
        grid_spec=pltpu.PrefetchScalarGridSpec(
            num_scalar_prefetch=0,
            grid=(grid,),
            in_specs=[
                pl.BlockSpec((FC, b_tile * T), lambda b: (0, b)),    # x tile (bf16)
                pl.BlockSpec((E, FC), const),                        # fused spatial weight
                pl.BlockSpec((E, 1), const),                         # fused bias/BN shift
                pl.BlockSpec((b_tile * T, b_tile * n_win), const),   # window selector S
                pl.BlockSpec((b_tile * n_win, b_tile * T), const),   # S^T
                pl.BlockSpec((E, b_tile * n_win), const),            # tiled lconv weights
                pl.BlockSpec((b_tile * n_win, b_tile), const),       # per-batch window sum G
                pl.BlockSpec((E, n_cls_pad), const),                 # classifier weight
                pl.BlockSpec((1, n_cls_pad), const),                 # classifier bias
            ],
            out_specs=pl.BlockSpec((b_tile, n_cls_pad), lambda b: (b, 0)),
        ),
        compiler_params=pltpu.CompilerParams(
            dimension_semantics=("parallel",),
            vmem_limit_bytes=32 * 1024 * 1024,
        ),
    )(xk, w_fused, shift, sel, sel_t, wct, gmat, w_cls_pad, b_cls_pad)
    return out[:B, :n_cls]


def init_params(key, *, n_bands, n_channels, n_samples, n_classes,
                embed_dim, win_len, heads):
    assert embed_dim % heads == 0
    n_win = n_samples // win_len
    FC = n_bands * n_channels
    ks = jax.random.split(key, 8)

    # Conv2d(n_bands, embed_dim, (n_channels, 1)) weight reshaped to (E, F*Ch)
    w_spatial = (0.1 * jax.random.normal(ks[0], (embed_dim, FC))).astype(jnp.float32)
    b_spatial = (0.1 * jax.random.normal(ks[1], (embed_dim, 1))).astype(jnp.float32)

    # BatchNorm2d: eval-mode (running stats).
    # TODO(synk): training-mode BatchNorm (batch statistics) needs a cross-batch
    # reduction pass; eval-mode semantics implemented here.
    gamma = 1.0 + 0.1 * jax.random.normal(ks[2], (embed_dim,))
    beta = 0.1 * jax.random.normal(ks[3], (embed_dim,))
    run_mean = 0.1 * jax.random.normal(ks[4], (embed_dim,))
    run_var = 1.0 + 0.1 * jax.random.uniform(ks[5], (embed_dim,))
    eps = 1e-5
    inv_std = gamma / jnp.sqrt(run_var + eps)
    bn_scale = inv_std.reshape(embed_dim, 1).astype(jnp.float32)
    bn_shift = (beta - run_mean * inv_std).reshape(embed_dim, 1).astype(jnp.float32)

    # LightweightConv1d: weight (heads, 1, K=n_win), weight_softmax=True, bias=False.
    # Channel c uses head (c % heads) because C % heads == 0 in the view(-1, H, T).
    w_conv = jax.random.normal(ks[6], (heads, 1, n_win)).astype(jnp.float32)
    w_sm = jax.nn.softmax(w_conv, axis=-1)[:, 0, :]                  # (H, n_win)
    w_conv_per_ch = w_sm[jnp.arange(embed_dim) % heads]              # (E, n_win)

    # Linear(embed_dim, n_classes) -> stored transposed (E, Ncls)
    w_cls = (0.1 * jax.random.normal(ks[7], (n_classes, embed_dim))).astype(jnp.float32).T
    b_cls = jnp.zeros((1, n_classes), jnp.float32)

    return dict(w_spatial=w_spatial, b_spatial=b_spatial, bn_scale=bn_scale,
                bn_shift=bn_shift, w_conv_per_ch=w_conv_per_ch,
                w_cls=w_cls, b_cls=b_cls)


def reference_forward(x, params, *, win_len):
    """Pure-JAX reference replicating the PyTorch forward semantics.

    Matmul inputs are rounded to bf16 exactly like the kernel (f32 accumulation);
    everything downstream stays f32.
    """
    B, F, Ch, T = x.shape
    x2 = x.reshape(B, F * Ch, T)
    w_fused = params["bn_scale"] * params["w_spatial"]
    shift = params["bn_scale"] * params["b_spatial"] + params["bn_shift"]
    xb = x2.astype(jnp.bfloat16).astype(jnp.float32)
    wb = w_fused.astype(jnp.bfloat16).astype(jnp.float32)
    z = jnp.einsum("ef,bft->bet", wb, xb,
                   precision=jax.lax.Precision.HIGHEST) + shift[None]
    z = jnp.where(z > 0, z, jnp.exp(jnp.minimum(z, 0.0)) - 1.0)
    E = z.shape[1]
    n_win = T // win_len
    zw = z.reshape(B, E, n_win, win_len)
    var = jnp.var(zw, axis=-1, ddof=1)                         # torch.var unbiased
    lv = jnp.log(jnp.clip(var, 1e-6, 1e6))                     # (B, E, n_win)
    y = jnp.sum(lv * params["w_conv_per_ch"][None], axis=-1)   # (B, E)
    logits = jnp.einsum("be,ec->bc", y, params["w_cls"],
                        precision=jax.lax.Precision.HIGHEST) + params["b_cls"]
    return jax.nn.log_softmax(logits, axis=1)


if __name__ == "__main__":
    # Small but structurally consistent config; batch gives a grid of length 2
    # so both TensorCores get work on v7x.
    B, n_bands, n_channels, n_samples = 16, 4, 8, 128
    n_classes, embed_dim, win_len, heads = 3, 16, 32, 4

    key = jax.random.PRNGKey(0)
    kx, kp = jax.random.split(key)
    x = jax.random.normal(kx, (B, n_bands, n_channels, n_samples), dtype=jnp.float32)
    params = init_params(kp, n_bands=n_bands, n_channels=n_channels,
                         n_samples=n_samples, n_classes=n_classes,
                         embed_dim=embed_dim, win_len=win_len, heads=heads)

    out = lightconvnet_forward(x, params, win_len=win_len)
    out = jax.block_until_ready(out)

    ref = reference_forward(x, params, win_len=win_len)
    assert out.shape == (B, n_classes), out.shape
    assert jnp.allclose(out, ref, atol=2e-3, rtol=2e-3), (out, ref)
    print("KERNEL_OK")
</pallas_src>

<mosaic_0001>
module attributes {stable_mosaic.version = 11 : i64} {
  func.func @lightconvnet_kernel(%arg0: i32, %arg1: memref<32x1024xbf16, #tpu.memory_space<vmem>>, %arg2: memref<16x32xbf16, #tpu.memory_space<vmem>>, %arg3: memref<16x1xf32, #tpu.memory_space<vmem>>, %arg4: memref<1024x32xf32, #tpu.memory_space<vmem>>, %arg5: memref<32x1024xf32, #tpu.memory_space<vmem>>, %arg6: memref<16x32xf32, #tpu.memory_space<vmem>>, %arg7: memref<32x8xf32, #tpu.memory_space<vmem>>, %arg8: memref<16x128xf32, #tpu.memory_space<vmem>>, %arg9: memref<1x128xf32, #tpu.memory_space<vmem>>, %arg10: memref<8x128xf32, #tpu.memory_space<vmem>>) attributes {dimension_semantics = [#tpu.dimension_semantics<parallel>], iteration_bounds = array<i64: 2>, scalar_prefetch = 0 : i64, scratch_operands = 0 : i64, tpu.core_type = #tpu.core_type<tc>, window_params = [{transform_indices = @transform_0, window_bounds = array<i64: 32, 1024>}, {pipeline_mode = #tpu.pipeline_mode<synchronous>, transform_indices = @transform_1, window_bounds = array<i64: 16, 32>}, {pipeline_mode = #tpu.pipeline_mode<synchronous>, transform_indices = @transform_2, window_bounds = array<i64: 16, 1>}, {pipeline_mode = #tpu.pipeline_mode<synchronous>, transform_indices = @transform_3, window_bounds = array<i64: 1024, 32>}, {pipeline_mode = #tpu.pipeline_mode<synchronous>, transform_indices = @transform_4, window_bounds = array<i64: 32, 1024>}, {pipeline_mode = #tpu.pipeline_mode<synchronous>, transform_indices = @transform_5, window_bounds = array<i64: 16, 32>}, {pipeline_mode = #tpu.pipeline_mode<synchronous>, transform_indices = @transform_6, window_bounds = array<i64: 32, 8>}, {pipeline_mode = #tpu.pipeline_mode<synchronous>, transform_indices = @transform_7, window_bounds = array<i64: 16, 128>}, {pipeline_mode = #tpu.pipeline_mode<synchronous>, transform_indices = @transform_8, window_bounds = array<i64: 1, 128>}, {transform_indices = @transform_9, window_bounds = array<i64: 8, 128>}]} {
    %c0 = arith.constant 0 : index
    %c0_0 = arith.constant 0 : index
    %0 = vector.load %arg2[%c0, %c0_0] : memref<16x32xbf16, #tpu.memory_space<vmem>>, vector<16x32xbf16>
    %c0_1 = arith.constant 0 : index
    %c0_2 = arith.constant 0 : index
    %1 = vector.load %arg1[%c0_1, %c0_2] : memref<32x1024xbf16, #tpu.memory_space<vmem>>, vector<32x1024xbf16>
    %cst = arith.constant dense<0.000000e+00> : vector<16x1024xf32>
    %2 = tpu.matmul %0, %1, %cst {dimension_numbers = #tpu.dot_dimension_numbers<[1], [0], [0], [1], [0, 0, 1, 1], [], []>} : vector<16x32xbf16>, vector<32x1024xbf16>, vector<16x1024xf32> -> vector<16x1024xf32>
    %c0_3 = arith.constant 0 : index
    %c0_4 = arith.constant 0 : index
    %3 = vector.load %arg3[%c0_3, %c0_4] : memref<16x1xf32, #tpu.memory_space<vmem>>, vector<16x1xf32>
    %4 = vector.broadcast %3 : vector<16x1xf32> to vector<16x1024xf32>
    %5 = arith.addf %2, %4 : vector<16x1024xf32>
    %cst_5 = arith.constant 0.000000e+00 : f32
    %6 = vector.broadcast %cst_5 : f32 to vector<16x1024xf32>
    %7 = arith.cmpf ogt, %5, %6 : vector<16x1024xf32>
    %cst_6 = arith.constant 0.000000e+00 : f32
    %8 = vector.broadcast %cst_6 : f32 to vector<16x1024xf32>
    %9 = arith.minimumf %5, %8 : vector<16x1024xf32>
    %10 = math.exp %9 : vector<16x1024xf32>
    %cst_7 = arith.constant 1.000000e+00 : f32
    %11 = vector.broadcast %cst_7 : f32 to vector<16x1024xf32>
    %12 = arith.subf %10, %11 : vector<16x1024xf32>
    %13 = arith.select %7, %5, %12 : vector<16x1024xi1>, vector<16x1024xf32>
    %c0_8 = arith.constant 0 : index
    %c0_9 = arith.constant 0 : index
    %14 = vector.load %arg4[%c0_8, %c0_9] : memref<1024x32xf32, #tpu.memory_space<vmem>>, vector<1024x32xf32>
    %cst_10 = arith.constant dense<0.000000e+00> : vector<16x32xf32>
    %15 = tpu.matmul %13, %14, %cst_10 {dimension_numbers = #tpu.dot_dimension_numbers<[1], [0], [0], [1], [0, 0, 1, 1], [], []>} : vector<16x1024xf32>, vector<1024x32xf32>, vector<16x32xf32> -> vector<16x32xf32>
    %cst_11 = arith.constant 3.125000e-02 : f32
    %16 = vector.broadcast %cst_11 : f32 to vector<16x32xf32>
    %17 = arith.mulf %15, %16 : vector<16x32xf32>
    %c0_12 = arith.constant 0 : index
    %c0_13 = arith.constant 0 : index
    %18 = vector.load %arg5[%c0_12, %c0_13] : memref<32x1024xf32, #tpu.memory_space<vmem>>, vector<32x1024xf32>
    %cst_14 = arith.constant dense<0.000000e+00> : vector<16x1024xf32>
    %19 = tpu.matmul %17, %18, %cst_14 {dimension_numbers = #tpu.dot_dimension_numbers<[1], [0], [0], [1], [0, 0, 1, 1], [], []>} : vector<16x32xf32>, vector<32x1024xf32>, vector<16x1024xf32> -> vector<16x1024xf32>
    %20 = arith.subf %13, %19 : vector<16x1024xf32>
    %21 = arith.mulf %20, %20 : vector<16x1024xf32>
    %cst_15 = arith.constant dense<0.000000e+00> : vector<16x32xf32>
    %22 = tpu.matmul %21, %14, %cst_15 {dimension_numbers = #tpu.dot_dimension_numbers<[1], [0], [0], [1], [0, 0, 1, 1], [], []>} : vector<16x1024xf32>, vector<1024x32xf32>, vector<16x32xf32> -> vector<16x32xf32>
    %cst_16 = arith.constant 0.0322580636 : f32
    %23 = vector.broadcast %cst_16 : f32 to vector<16x32xf32>
    %24 = arith.mulf %22, %23 : vector<16x32xf32>
    %cst_17 = arith.constant 9.99999997E-7 : f32
    %cst_18 = arith.constant 1.000000e+06 : f32
    %25 = vector.broadcast %cst_17 : f32 to vector<16x32xf32>
    %26 = arith.maximumf %25, %24 : vector<16x32xf32>
    %27 = vector.broadcast %cst_18 : f32 to vector<16x32xf32>
    %28 = arith.minimumf %27, %26 : vector<16x32xf32>
    %29 = math.log %28 : vector<16x32xf32>
    %c0_19 = arith.constant 0 : index
    %c0_20 = arith.constant 0 : index
    %30 = vector.load %arg6[%c0_19, %c0_20] : memref<16x32xf32, #tpu.memory_space<vmem>>, vector<16x32xf32>
    %31 = arith.mulf %29, %30 : vector<16x32xf32>
    %c0_21 = arith.constant 0 : index
    %c0_22 = arith.constant 0 : index
    %32 = vector.load %arg7[%c0_21, %c0_22] : memref<32x8xf32, #tpu.memory_space<vmem>>, vector<32x8xf32>
    %cst_23 = arith.constant dense<0.000000e+00> : vector<16x8xf32>
    %33 = tpu.matmul %31, %32, %cst_23 {dimension_numbers = #tpu.dot_dimension_numbers<[1], [0], [0], [1], [0, 0, 1, 1], [], []>} : vector<16x32xf32>, vector<32x8xf32>, vector<16x8xf32> -> vector<16x8xf32>
    %c0_24 = arith.constant 0 : index
    %c0_25 = arith.constant 0 : index
    %34 = vector.load %arg8[%c0_24, %c0_25] : memref<16x128xf32, #tpu.memory_space<vmem>>, vector<16x128xf32>
    %c0_26 = arith.constant 0 : index
    %c0_27 = arith.constant 0 : index
    %35 = vector.load %arg9[%c0_26, %c0_27] : memref<1x128xf32, #tpu.memory_space<vmem>>, vector<1x128xf32>
    %36 = vector.extract_strided_slice %33 {offsets = [0, 0], sizes = [16, 1], strides = [1, 1]} : vector<16x8xf32> to vector<16x1xf32>
    %37 = vector.broadcast %36 : vector<16x1xf32> to vector<16x128xf32>
    %38 = arith.mulf %37, %34 : vector<16x128xf32>
    %cst_28 = arith.constant dense<0.000000e+00> : vector<128xf32>
    %39 = vector.multi_reduction <add>, %38, %cst_28 [0] : vector<16x128xf32> to vector<128xf32>
    %40 = vector.shape_cast %39 : vector<128xf32> to vector<1x128xf32>
    %41 = arith.addf %40, %35 : vector<1x128xf32>
    %cst_29 = arith.constant dense<0xFF800000> : vector<1xf32>
    %42 = vector.multi_reduction <maximumf>, %41, %cst_29 [1] : vector<1x128xf32> to vector<1xf32>
    %43 = vector.shape_cast %42 : vector<1xf32> to vector<1x1xf32>
    %44 = vector.broadcast %43 : vector<1x1xf32> to vector<1x128xf32>
    %45 = arith.subf %41, %44 : vector<1x128xf32>
    %46 = math.exp %45 : vector<1x128xf32>
    %cst_30 = arith.constant dense<0.000000e+00> : vector<1xf32>
    %47 = vector.multi_reduction <add>, %46, %cst_30 [1] : vector<1x128xf32> to vector<1xf32>
    %48 = vector.shape_cast %47 : vector<1xf32> to vector<1x1xf32>
    %49 = math.log %48 : vector<1x1xf32>
    %50 = arith.addf %43, %49 : vector<1x1xf32>
    %51 = vector.broadcast %50 : vector<1x1xf32> to vector<1x128xf32>
    %52 = arith.subf %41, %51 : vector<1x128xf32>
    %c0_31 = arith.constant 0 : index
    %c0_32 = arith.constant 0 : index
    %53 = vector.load %arg10[%c0_31, %c0_32] : memref<8x128xf32, #tpu.memory_space<vmem>>, vector<1x128xf32>
    tpu.vector_store %arg10[%c0_31, %c0_32], %52 {strides = array<i32>} : memref<8x128xf32, #tpu.memory_space<vmem>>, vector<1x128xf32>,
    %54 = vector.extract_strided_slice %33 {offsets = [0, 1], sizes = [16, 1], strides = [1, 1]} : vector<16x8xf32> to vector<16x1xf32>
    %55 = vector.broadcast %54 : vector<16x1xf32> to vector<16x128xf32>
    %56 = arith.mulf %55, %34 : vector<16x128xf32>
    %cst_33 = arith.constant dense<0.000000e+00> : vector<128xf32>
    %57 = vector.multi_reduction <add>, %56, %cst_33 [0] : vector<16x128xf32> to vector<128xf32>
    %58 = vector.shape_cast %57 : vector<128xf32> to vector<1x128xf32>
    %59 = arith.addf %58, %35 : vector<1x128xf32>
    %cst_34 = arith.constant dense<0xFF800000> : vector<1xf32>
    %60 = vector.multi_reduction <maximumf>, %59, %cst_34 [1] : vector<1x128xf32> to vector<1xf32>
    %61 = vector.shape_cast %60 : vector<1xf32> to vector<1x1xf32>
    %62 = vector.broadcast %61 : vector<1x1xf32> to vector<1x128xf32>
    %63 = arith.subf %59, %62 : vector<1x128xf32>
    %64 = math.exp %63 : vector<1x128xf32>
    %cst_35 = arith.constant dense<0.000000e+00> : vector<1xf32>
    %65 = vector.multi_reduction <add>, %64, %cst_35 [1] : vector<1x128xf32> to vector<1xf32>
    %66 = vector.shape_cast %65 : vector<1xf32> to vector<1x1xf32>
    %67 = math.log %66 : vector<1x1xf32>
    %68 = arith.addf %61, %67 : vector<1x1xf32>
    %69 = vector.broadcast %68 : vector<1x1xf32> to vector<1x128xf32>
    %70 = arith.subf %59, %69 : vector<1x128xf32>
    %c1 = arith.constant 1 : index
    %c0_36 = arith.constant 0 : index
    %71 = vector.load %arg10[%c1, %c0_36] : memref<8x128xf32, #tpu.memory_space<vmem>>, vector<1x128xf32>
    tpu.vector_store %arg10[%c1, %c0_36], %70 {strides = array<i32>} : memref<8x128xf32, #tpu.memory_space<vmem>>, vector<1x128xf32>,
    %72 = vector.extract_strided_slice %33 {offsets = [0, 2], sizes = [16, 1], strides = [1, 1]} : vector<16x8xf32> to vector<16x1xf32>
    %73 = vector.broadcast %72 : vector<16x1xf32> to vector<16x128xf32>
    %74 = arith.mulf %73, %34 : vector<16x128xf32>
    %cst_37 = arith.constant dense<0.000000e+00> : vector<128xf32>
    %75 = vector.multi_reduction <add>, %74, %cst_37 [0] : vector<16x128xf32> to vector<128xf32>
    %76 = vector.shape_cast %75 : vector<128xf32> to vector<1x128xf32>
    %77 = arith.addf %76, %35 : vector<1x128xf32>
    %cst_38 = arith.constant dense<0xFF800000> : vector<1xf32>
    %78 = vector.multi_reduction <maximumf>, %77, %cst_38 [1] : vector<1x128xf32> to vector<1xf32>
    %79 = vector.shape_cast %78 : vector<1xf32> to vector<1x1xf32>
    %80 = vector.broadcast %79 : vector<1x1xf32> to vector<1x128xf32>
    %81 = arith.subf %77, %80 : vector<1x128xf32>
    %82 = math.exp %81 : vector<1x128xf32>
    %cst_39 = arith.constant dense<0.000000e+00> : vector<1xf32>
    %83 = vector.multi_reduction <add>, %82, %cst_39 [1] : vector<1x128xf32> to vector<1xf32>
    %84 = vector.shape_cast %83 : vector<1xf32> to vector<1x1xf32>
    %85 = math.log %84 : vector<1x1xf32>
    %86 = arith.addf %79, %85 : vector<1x1xf32>
    %87 = vector.broadcast %86 : vector<1x1xf32> to vector<1x128xf32>
    %88 = arith.subf %77, %87 : vector<1x128xf32>
    %c2 = arith.constant 2 : index
    %c0_40 = arith.constant 0 : index
    %89 = vector.load %arg10[%c2, %c0_40] : memref<8x128xf32, #tpu.memory_space<vmem>>, vector<1x128xf32>
    tpu.vector_store %arg10[%c2, %c0_40], %88 {strides = array<i32>} : memref<8x128xf32, #tpu.memory_space<vmem>>, vector<1x128xf32>,
    %90 = vector.extract_strided_slice %33 {offsets = [0, 3], sizes = [16, 1], strides = [1, 1]} : vector<16x8xf32> to vector<16x1xf32>
    %91 = vector.broadcast %90 : vector<16x1xf32> to vector<16x128xf32>
    %92 = arith.mulf %91, %34 : vector<16x128xf32>
    %cst_41 = arith.constant dense<0.000000e+00> : vector<128xf32>
    %93 = vector.multi_reduction <add>, %92, %cst_41 [0] : vector<16x128xf32> to vector<128xf32>
    %94 = vector.shape_cast %93 : vector<128xf32> to vector<1x128xf32>
    %95 = arith.addf %94, %35 : vector<1x128xf32>
    %cst_42 = arith.constant dense<0xFF800000> : vector<1xf32>
    %96 = vector.multi_reduction <maximumf>, %95, %cst_42 [1] : vector<1x128xf32> to vector<1xf32>
    %97 = vector.shape_cast %96 : vector<1xf32> to vector<1x1xf32>
    %98 = vector.broadcast %97 : vector<1x1xf32> to vector<1x128xf32>
    %99 = arith.subf %95, %98 : vector<1x128xf32>
    %100 = math.exp %99 : vector<1x128xf32>
    %cst_43 = arith.constant dense<0.000000e+00> : vector<1xf32>
    %101 = vector.multi_reduction <add>, %100, %cst_43 [1] : vector<1x128xf32> to vector<1xf32>
    %102 = vector.shape_cast %101 : vector<1xf32> to vector<1x1xf32>
    %103 = math.log %102 : vector<1x1xf32>
    %104 = arith.addf %97, %103 : vector<1x1xf32>
    %105 = vector.broadcast %104 : vector<1x1xf32> to vector<1x128xf32>
    %106 = arith.subf %95, %105 : vector<1x128xf32>
    %c3 = arith.constant 3 : index
    %c0_44 = arith.constant 0 : index
    %107 = vector.load %arg10[%c3, %c0_44] : memref<8x128xf32, #tpu.memory_space<vmem>>, vector<1x128xf32>
    tpu.vector_store %arg10[%c3, %c0_44], %106 {strides = array<i32>} : memref<8x128xf32, #tpu.memory_space<vmem>>, vector<1x128xf32>,
    %108 = vector.extract_strided_slice %33 {offsets = [0, 4], sizes = [16, 1], strides = [1, 1]} : vector<16x8xf32> to vector<16x1xf32>
    %109 = vector.broadcast %108 : vector<16x1xf32> to vector<16x128xf32>
    %110 = arith.mulf %109, %34 : vector<16x128xf32>
    %cst_45 = arith.constant dense<0.000000e+00> : vector<128xf32>
    %111 = vector.multi_reduction <add>, %110, %cst_45 [0] : vector<16x128xf32> to vector<128xf32>
    %112 = vector.shape_cast %111 : vector<128xf32> to vector<1x128xf32>
    %113 = arith.addf %112, %35 : vector<1x128xf32>
    %cst_46 = arith.constant dense<0xFF800000> : vector<1xf32>
    %114 = vector.multi_reduction <maximumf>, %113, %cst_46 [1] : vector<1x128xf32> to vector<1xf32>
    %115 = vector.shape_cast %114 : vector<1xf32> to vector<1x1xf32>
    %116 = vector.broadcast %115 : vector<1x1xf32> to vector<1x128xf32>
    %117 = arith.subf %113, %116 : vector<1x128xf32>
    %118 = math.exp %117 : vector<1x128xf32>
    %cst_47 = arith.constant dense<0.000000e+00> : vector<1xf32>
    %119 = vector.multi_reduction <add>, %118, %cst_47 [1] : vector<1x128xf32> to vector<1xf32>
    %120 = vector.shape_cast %119 : vector<1xf32> to vector<1x1xf32>
    %121 = math.log %120 : vector<1x1xf32>
    %122 = arith.addf %115, %121 : vector<1x1xf32>
    %123 = vector.broadcast %122 : vector<1x1xf32> to vector<1x128xf32>
    %124 = arith.subf %113, %123 : vector<1x128xf32>
    %c4 = arith.constant 4 : index
    %c0_48 = arith.constant 0 : index
    %125 = vector.load %arg10[%c4, %c0_48] : memref<8x128xf32, #tpu.memory_space<vmem>>, vector<1x128xf32>
    tpu.vector_store %arg10[%c4, %c0_48], %124 {strides = array<i32>} : memref<8x128xf32, #tpu.memory_space<vmem>>, vector<1x128xf32>,
    %126 = vector.extract_strided_slice %33 {offsets = [0, 5], sizes = [16, 1], strides = [1, 1]} : vector<16x8xf32> to vector<16x1xf32>
    %127 = vector.broadcast %126 : vector<16x1xf32> to vector<16x128xf32>
    %128 = arith.mulf %127, %34 : vector<16x128xf32>
    %cst_49 = arith.constant dense<0.000000e+00> : vector<128xf32>
    %129 = vector.multi_reduction <add>, %128, %cst_49 [0] : vector<16x128xf32> to vector<128xf32>
    %130 = vector.shape_cast %129 : vector<128xf32> to vector<1x128xf32>
    %131 = arith.addf %130, %35 : vector<1x128xf32>
    %cst_50 = arith.constant dense<0xFF800000> : vector<1xf32>
    %132 = vector.multi_reduction <maximumf>, %131, %cst_50 [1] : vector<1x128xf32> to vector<1xf32>
    %133 = vector.shape_cast %132 : vector<1xf32> to vector<1x1xf32>
    %134 = vector.broadcast %133 : vector<1x1xf32> to vector<1x128xf32>
    %135 = arith.subf %131, %134 : vector<1x128xf32>
    %136 = math.exp %135 : vector<1x128xf32>
    %cst_51 = arith.constant dense<0.000000e+00> : vector<1xf32>
    %137 = vector.multi_reduction <add>, %136, %cst_51 [1] : vector<1x128xf32> to vector<1xf32>
    %138 = vector.shape_cast %137 : vector<1xf32> to vector<1x1xf32>
    %139 = math.log %138 : vector<1x1xf32>
    %140 = arith.addf %133, %139 : vector<1x1xf32>
    %141 = vector.broadcast %140 : vector<1x1xf32> to vector<1x128xf32>
    %142 = arith.subf %131, %141 : vector<1x128xf32>
    %c5 = arith.constant 5 : index
    %c0_52 = arith.constant 0 : index
    %143 = vector.load %arg10[%c5, %c0_52] : memref<8x128xf32, #tpu.memory_space<vmem>>, vector<1x128xf32>
    tpu.vector_store %arg10[%c5, %c0_52], %142 {strides = array<i32>} : memref<8x128xf32, #tpu.memory_space<vmem>>, vector<1x128xf32>,
    %144 = vector.extract_strided_slice %33 {offsets = [0, 6], sizes = [16, 1], strides = [1, 1]} : vector<16x8xf32> to vector<16x1xf32>
    %145 = vector.broadcast %144 : vector<16x1xf32> to vector<16x128xf32>
    %146 = arith.mulf %145, %34 : vector<16x128xf32>
    %cst_53 = arith.constant dense<0.000000e+00> : vector<128xf32>
    %147 = vector.multi_reduction <add>, %146, %cst_53 [0] : vector<16x128xf32> to vector<128xf32>
    %148 = vector.shape_cast %147 : vector<128xf32> to vector<1x128xf32>
    %149 = arith.addf %148, %35 : vector<1x128xf32>
    %cst_54 = arith.constant dense<0xFF800000> : vector<1xf32>
    %150 = vector.multi_reduction <maximumf>, %149, %cst_54 [1] : vector<1x128xf32> to vector<1xf32>
    %151 = vector.shape_cast %150 : vector<1xf32> to vector<1x1xf32>
    %152 = vector.broadcast %151 : vector<1x1xf32> to vector<1x128xf32>
    %153 = arith.subf %149, %152 : vector<1x128xf32>
    %154 = math.exp %153 : vector<1x128xf32>
    %cst_55 = arith.constant dense<0.000000e+00> : vector<1xf32>
    %155 = vector.multi_reduction <add>, %154, %cst_55 [1] : vector<1x128xf32> to vector<1xf32>
    %156 = vector.shape_cast %155 : vector<1xf32> to vector<1x1xf32>
    %157 = math.log %156 : vector<1x1xf32>
    %158 = arith.addf %151, %157 : vector<1x1xf32>
    %159 = vector.broadcast %158 : vector<1x1xf32> to vector<1x128xf32>
    %160 = arith.subf %149, %159 : vector<1x128xf32>
    %c6 = arith.constant 6 : index
    %c0_56 = arith.constant 0 : index
    %161 = vector.load %arg10[%c6, %c0_56] : memref<8x128xf32, #tpu.memory_space<vmem>>, vector<1x128xf32>
    tpu.vector_store %arg10[%c6, %c0_56], %160 {strides = array<i32>} : memref<8x128xf32, #tpu.memory_space<vmem>>, vector<1x128xf32>,
    %162 = vector.extract_strided_slice %33 {offsets = [0, 7], sizes = [16, 1], strides = [1, 1]} : vector<16x8xf32> to vector<16x1xf32>
    %163 = vector.broadcast %162 : vector<16x1xf32> to vector<16x128xf32>
    %164 = arith.mulf %163, %34 : vector<16x128xf32>
    %cst_57 = arith.constant dense<0.000000e+00> : vector<128xf32>
    %165 = vector.multi_reduction <add>, %164, %cst_57 [0] : vector<16x128xf32> to vector<128xf32>
    %166 = vector.shape_cast %165 : vector<128xf32> to vector<1x128xf32>
    %167 = arith.addf %166, %35 : vector<1x128xf32>
    %cst_58 = arith.constant dense<0xFF800000> : vector<1xf32>
    %168 = vector.multi_reduction <maximumf>, %167, %cst_58 [1] : vector<1x128xf32> to vector<1xf32>
    %169 = vector.shape_cast %168 : vector<1xf32> to vector<1x1xf32>
    %170 = vector.broadcast %169 : vector<1x1xf32> to vector<1x128xf32>
    %171 = arith.subf %167, %170 : vector<1x128xf32>
    %172 = math.exp %171 : vector<1x128xf32>
    %cst_59 = arith.constant dense<0.000000e+00> : vector<1xf32>
    %173 = vector.multi_reduction <add>, %172, %cst_59 [1] : vector<1x128xf32> to vector<1xf32>
    %174 = vector.shape_cast %173 : vector<1xf32> to vector<1x1xf32>
    %175 = math.log %174 : vector<1x1xf32>
    %176 = arith.addf %169, %175 : vector<1x1xf32>
    %177 = vector.broadcast %176 : vector<1x1xf32> to vector<1x128xf32>
    %178 = arith.subf %167, %177 : vector<1x128xf32>
    %c7 = arith.constant 7 : index
    %c0_60 = arith.constant 0 : index
    %179 = vector.load %arg10[%c7, %c0_60] : memref<8x128xf32, #tpu.memory_space<vmem>>, vector<1x128xf32>
    tpu.vector_store %arg10[%c7, %c0_60], %178 {strides = array<i32>} : memref<8x128xf32, #tpu.memory_space<vmem>>, vector<1x128xf32>,
    return
  }
  func.func @transform_0(%arg0: i32) -> (i32, i32) {
    %c0_i32 = arith.constant 0 : i32
    %c0_i32_0 = arith.constant 0 : i32
    return %c0_i32, %arg0 : i32, i32
  }
  func.func @transform_1(%arg0: i32) -> (i32, i32) {
    %c0_i32 = arith.constant 0 : i32
    %c0_i32_0 = arith.constant 0 : i32
    %c0_i32_1 = arith.constant 0 : i32
    return %c0_i32, %c0_i32_0 : i32, i32
  }
  func.func @transform_2(%arg0: i32) -> (i32, i32) {
    %c0_i32 = arith.constant 0 : i32
    %c0_i32_0 = arith.constant 0 : i32
    %c0_i32_1 = arith.constant 0 : i32
    return %c0_i32, %c0_i32_0 : i32, i32
  }
  func.func @transform_3(%arg0: i32) -> (i32, i32) {
    %c0_i32 = arith.constant 0 : i32
    %c0_i32_0 = arith.constant 0 : i32
    %c0_i32_1 = arith.constant 0 : i32
    return %c0_i32, %c0_i32_0 : i32, i32
  }
  func.func @transform_4(%arg0: i32) -> (i32, i32) {
    %c0_i32 = arith.constant 0 : i32
    %c0_i32_0 = arith.constant 0 : i32
    %c0_i32_1 = arith.constant 0 : i32
    return %c0_i32, %c0_i32_0 : i32, i32
  }
  func.func @transform_5(%arg0: i32) -> (i32, i32) {
    %c0_i32 = arith.constant 0 : i32
    %c0_i32_0 = arith.constant 0 : i32
    %c0_i32_1 = arith.constant 0 : i32
    return %c0_i32, %c0_i32_0 : i32, i32
  }
  func.func @transform_6(%arg0: i32) -> (i32, i32) {
    %c0_i32 = arith.constant 0 : i32
    %c0_i32_0 = arith.constant 0 : i32
    %c0_i32_1 = arith.constant 0 : i32
    return %c0_i32, %c0_i32_0 : i32, i32
  }
  func.func @transform_7(%arg0: i32) -> (i32, i32) {
    %c0_i32 = arith.constant 0 : i32
    %c0_i32_0 = arith.constant 0 : i32
    %c0_i32_1 = arith.constant 0 : i32
    return %c0_i32, %c0_i32_0 : i32, i32
  }
  func.func @transform_8(%arg0: i32) -> (i32, i32) {
    %c0_i32 = arith.constant 0 : i32
    %c0_i32_0 = arith.constant 0 : i32
    %c0_i32_1 = arith.constant 0 : i32
    return %c0_i32, %c0_i32_0 : i32, i32
  }
  func.func @transform_9(%arg0: i32) -> (i32, i32) {
    %c0_i32 = arith.constant 0 : i32
    %c0_i32_0 = arith.constant 0 : i32
    return %arg0, %c0_i32 : i32, i32
  }
}

</mosaic_0001>

<llo_original>
// kernel: tpu_custom_call.1
$region0: #{tpu_custom_call.1}
  #allocation0 [shape = 'u32[]', space=smem, size = 0x4, offset = 0x4, fixed_abs, tag = 'smem constant byte address 0x4 - core index']
  #allocation1 [shape = 'u32[72,128]{1,0:T(1,128)}', space=vmem, size = 0x9000, scoped, tag = 'internal scratch']
  %s0 = inlined_call_operand.vmem [shape: bf16[32,2048], index: 0, kind: input, shape index: {}]
  %s1 = inlined_call_operand.vmem [shape: bf16[16,32], index: 1, kind: input, shape index: {}]
  %s2 = inlined_call_operand.vmem [shape: f32[16,1], index: 2, kind: input, shape index: {}]
  %s3 = inlined_call_operand.vmem [shape: f32[1024,32], index: 3, kind: input, shape index: {}]
  %s4 = inlined_call_operand.vmem [shape: f32[32,1024], index: 4, kind: input, shape index: {}]
  %s5 = inlined_call_operand.vmem [shape: f32[16,32], index: 5, kind: input, shape index: {}]
  %s6 = inlined_call_operand.vmem [shape: f32[32,8], index: 6, kind: input, shape index: {}]
  %s7 = inlined_call_operand.vmem [shape: f32[16,128], index: 7, kind: input, shape index: {}]
  %s8 = inlined_call_operand.vmem [shape: f32[1,128], index: 8, kind: input, shape index: {}]
  %s9 = inlined_call_operand.hbm [shape: f32[16,128], index: 9, kind: output, shape index: {}]
  %s10 = sld [smem:[#allocation0]]
  $region92: #{tpu_custom_call.1} parent=0
    _
  %s12 = ssub.s32 1, %s10
  %s13 = scalar_select 0, %s12, %s10
  $region1: #{tpu_custom_call.1} parent=0
    #allocation2 [shape = 'u8[131072]{0}', space=vmem, size = 0x20000, scoped, tag = 'input window, operand 0']
    #allocation3 [shape = 'u8[8192]{0}', space=vmem, size = 0x2000, scoped, tag = 'output window, operand 0']
    #allocation4 [shape = 's32[2]{0}', space=sflag, size = 0x8, scoped, tag = 'scoped memory for tpu_custom_call.1']
    %14 = vsyncpa [#allocation4], 0
    %s15 = scalar_lea.sflag [#allocation4], 1
    %16 = vsyncpa %s15, 0
    loop: start=0, step=1, limit=4
    $region2: #{tpu_custom_call.1} parent=1 // loop_pre_header
      _
    $region3: #{tpu_custom_call.1} parent=1 // loop_header
      %s18 = sphi 0, %s22
      %p19 = scmp.ge.s32.totalorder %s18, 4
      %s28 = sphi 0, %s30
      %s31 = sphi 0, %s28
      %s32 = sphi 0, %s31
      %s48 = sphi 0, %s32
      %s52 = sphi 0, %s52
      %s54 = sphi 0, %s52
      %s55 = sphi 0, %s54
      %s69 = sphi 0, %s55
      %s73 = sphi 0, %s73
      %s75 = sphi 0, %s73
      %s76 = sphi 0, %s75
      %s90 = sphi 0, %s76
      %s94 = sphi 0, %s94
      %s96 = sphi 0, %s94
      %s97 = sphi 0, %s96
      %s111 = sphi 0, %s97
      %s115 = sphi 0, %s115
      %s117 = sphi 0, %s115
      %s118 = sphi 0, %s117
      %s132 = sphi 0, %s118
      %s136 = sphi 0, %s136
      %s138 = sphi 0, %s136
      %s139 = sphi 0, %s138
      %s153 = sphi 0, %s139
      %s157 = sphi 0, %s157
      %s159 = sphi 0, %s157
      %s160 = sphi 0, %s159
      %s174 = sphi 0, %s160
      %s178 = sphi 0, %s178
      %s180 = sphi 0, %s178
      %s181 = sphi 0, %s180
      %s195 = sphi 0, %s181
      %s199 = sphi 0, %s199
      %s201 = sphi 0, %s199
      %s202 = sphi 0, %s201
      %s216 = sphi 0, %s202
      %s222 = sphi 0, %s224
      %s225 = sphi 0, %s222
      %s226 = sphi 0, %s225
      %s242 = sphi 0, %s226
    $region4: #{tpu_custom_call.1} parent=1 // loop_header_branch
      %21 = sbr.rel (%p19) target = $region8
    $region5: #{tpu_custom_call.1} parent=1 // loop_body
      %s23 = ssub.s32 %s18, 1
      %s24 = ssub.s32 %s18, 2
      %s25 = sadd.s32 %s18, 1
      %s26 = ssub.s32 %s18, %s25
      %p27 = scmp.eq.s32.totalorder %s26, 0
      %s29 = sadd.s32 %s28, 1
      %s30 = scalar_select %p27, %s28, %s29
      %p33 = pneg %p27
      %p34 = scmp.eq.s32.totalorder %s18, 1
      %p35 = por %p33, %p34
      %p36 = scmp.ne.s32.totalorder %s28, %s31
      %p37 = scmp.eq.s32.totalorder %s18, 0
      %p38 = por %p36, %p37
      %p39 = scmp.ne.s32.totalorder %s28, %s31
      %p40 = scmp.eq.s32.totalorder %s23, 1
      %p41 = por %p39, %p40
      %p42 = scmp.ne.s32.totalorder %s31, %s32
      %p43 = scmp.eq.s32.totalorder %s23, 0
      %p44 = por %p42, %p43
      %p45 = scmp.ne.s32.totalorder %s31, %s32
      %p46 = scmp.eq.s32.totalorder %s24, 1
      %p47 = por %p45, %p46
      %p49 = scmp.ne.s32.totalorder %s32, %s48
      %p50 = scmp.eq.s32.totalorder %s24, 0
      %p51 = por %p49, %p50
      %s53 = sadd.s32 %s52, 1
      %p56 = scmp.eq.s32.totalorder %s18, 1
      %p57 = scmp.ne.s32.totalorder %s52, %s54
      %p58 = scmp.eq.s32.totalorder %s18, 0
      %p59 = por %p57, %p58
      %p60 = scmp.ne.s32.totalorder %s52, %s54
      %p61 = scmp.eq.s32.totalorder %s23, 1
      %p62 = por %p60, %p61
      %p63 = scmp.ne.s32.totalorder %s54, %s55
      %p64 = scmp.eq.s32.totalorder %s23, 0
      %p65 = por %p63, %p64
      %p66 = scmp.ne.s32.totalorder %s54, %s55
      %p67 = scmp.eq.s32.totalorder %s24, 1
      %p68 = por %p66, %p67
      %p70 = scmp.ne.s32.totalorder %s55, %s69
      %p71 = scmp.eq.s32.totalorder %s24, 0
      %p72 = por %p70, %p71
      %s74 = sadd.s32 %s73, 1
      %p77 = scmp.eq.s32.totalorder %s18, 1
      %p78 = scmp.ne.s32.totalorder %s73, %s75
      %p79 = scmp.eq.s32.totalorder %s18, 0
      %p80 = por %p78, %p79
      %p81 = scmp.ne.s32.totalorder %s73, %s75
      %p82 = scmp.eq.s32.totalorder %s23, 1
      %p83 = por %p81, %p82
      %p84 = scmp.ne.s32.totalorder %s75, %s76
      %p85 = scmp.eq.s32.totalorder %s23, 0
      %p86 = por %p84, %p85
      %p87 = scmp.ne.s32.totalorder %s75, %s76
      %p88 = scmp.eq.s32.totalorder %s24, 1
      %p89 = por %p87, %p88
      %p91 = scmp.ne.s32.totalorder %s76, %s90
      %p92 = scmp.eq.s32.totalorder %s24, 0
      %p93 = por %p91, %p92
      %s95 = sadd.s32 %s94, 1
      %p98 = scmp.eq.s32.totalorder %s18, 1
      %p99 = scmp.ne.s32.totalorder %s94, %s96
      %p100 = scmp.eq.s32.totalorder %s18, 0
      %p101 = por %p99, %p100
      %p102 = scmp.ne.s32.totalorder %s94, %s96
      %p103 = scmp.eq.s32.totalorder %s23, 1
      %p104 = por %p102, %p103
      %p105 = scmp.ne.s32.totalorder %s96, %s97
      %p106 = scmp.eq.s32.totalorder %s23, 0
      %p107 = por %p105, %p106
      %p108 = scmp.ne.s32.totalorder %s96, %s97
      %p109 = scmp.eq.s32.totalorder %s24, 1
      %p110 = por %p108, %p109
      %p112 = scmp.ne.s32.totalorder %s97, %s111
      %p113 = scmp.eq.s32.totalorder %s24, 0
      %p114 = por %p112, %p113
      %s116 = sadd.s32 %s115, 1
      %p119 = scmp.eq.s32.totalorder %s18, 1
      %p120 = scmp.ne.s32.totalorder %s115, %s117
      %p121 = scmp.eq.s32.totalorder %s18, 0
      %p122 = por %p120, %p121
      %p123 = scmp.ne.s32.totalorder %s115, %s117
      %p124 = scmp.eq.s32.totalorder %s23, 1
      %p125 = por %p123, %p124
      %p126 = scmp.ne.s32.totalorder %s117, %s118
      %p127 = scmp.eq.s32.totalorder %s23, 0
      %p128 = por %p126, %p127
      %p129 = scmp.ne.s32.totalorder %s117, %s118
      %p130 = scmp.eq.s32.totalorder %s24, 1
      %p131 = por %p129, %p130
      %p133 = scmp.ne.s32.totalorder %s118, %s132
      %p134 = scmp.eq.s32.totalorder %s24, 0
      %p135 = por %p133, %p134
      %s137 = sadd.s32 %s136, 1
      %p140 = scmp.eq.s32.totalorder %s18, 1
      %p141 = scmp.ne.s32.totalorder %s136, %s138
      %p142 = scmp.eq.s32.totalorder %s18, 0
      %p143 = por %p141, %p142
      %p144 = scmp.ne.s32.totalorder %s136, %s138
      %p145 = scmp.eq.s32.totalorder %s23, 1
      %p146 = por %p144, %p145
      %p147 = scmp.ne.s32.totalorder %s138, %s139
      %p148 = scmp.eq.s32.totalorder %s23, 0
      %p149 = por %p147, %p148
      %p150 = scmp.ne.s32.totalorder %s138, %s139
      %p151 = scmp.eq.s32.totalorder %s24, 1
      %p152 = por %p150, %p151
      %p154 = scmp.ne.s32.totalorder %s139, %s153
      %p155 = scmp.eq.s32.totalorder %s24, 0
      %p156 = por %p154, %p155
      %s158 = sadd.s32 %s157, 1
      %p161 = scmp.eq.s32.totalorder %s18, 1
      %p162 = scmp.ne.s32.totalorder %s157, %s159
      %p163 = scmp.eq.s32.totalorder %s18, 0
      %p164 = por %p162, %p163
      %p165 = scmp.ne.s32.totalorder %s157, %s159
      %p166 = scmp.eq.s32.totalorder %s23, 1
      %p167 = por %p165, %p166
      %p168 = scmp.ne.s32.totalorder %s159, %s160
      %p169 = scmp.eq.s32.totalorder %s23, 0
      %p170 = por %p168, %p169
      %p171 = scmp.ne.s32.totalorder %s159, %s160
      %p172 = scmp.eq.s32.totalorder %s24, 1
      %p173 = por %p171, %p172
      %p175 = scmp.ne.s32.totalorder %s160, %s174
      %p176 = scmp.eq.s32.totalorder %s24, 0
      %p177 = por %p175, %p176
      %s179 = sadd.s32 %s178, 1
      %p182 = scmp.eq.s32.totalorder %s18, 1
      %p183 = scmp.ne.s32.totalorder %s178, %s180
      %p184 = scmp.eq.s32.totalorder %s18, 0
      %p185 = por %p183, %p184
      %p186 = scmp.ne.s32.totalorder %s178, %s180
      %p187 = scmp.eq.s32.totalorder %s23, 1
      %p188 = por %p186, %p187
      %p189 = scmp.ne.s32.totalorder %s180, %s181
      %p190 = scmp.eq.s32.totalorder %s23, 0
      %p191 = por %p189, %p190
      %p192 = scmp.ne.s32.totalorder %s180, %s181
      %p193 = scmp.eq.s32.totalorder %s24, 1
      %p194 = por %p192, %p193
      %p196 = scmp.ne.s32.totalorder %s181, %s195
      %p197 = scmp.eq.s32.totalorder %s24, 0
      %p198 = por %p196, %p197
      %s200 = sadd.s32 %s199, 1
      %p203 = scmp.eq.s32.totalorder %s18, 1
      %p204 = scmp.ne.s32.totalorder %s199, %s201
      %p205 = scmp.eq.s32.totalorder %s18, 0
      %p206 = por %p204, %p205
      %p207 = scmp.ne.s32.totalorder %s199, %s201
      %p208 = scmp.eq.s32.totalorder %s23, 1
      %p209 = por %p207, %p208
      %p210 = scmp.ne.s32.totalorder %s201, %s202
      %p211 = scmp.eq.s32.totalorder %s23, 0
      %p212 = por %p210, %p211
      %p213 = scmp.ne.s32.totalorder %s201, %s202
      %p214 = scmp.eq.s32.totalorder %s24, 1
      %p215 = por %p213, %p214
      %p217 = scmp.ne.s32.totalorder %s202, %s216
      %p218 = scmp.eq.s32.totalorder %s24, 0
      %p219 = por %p217, %p218
      %s220 = ssub.s32 %s18, %s25
      %p221 = scmp.eq.s32.totalorder %s220, 0
      %s223 = sadd.s32 %s222, 1
      %s224 = scalar_select %p221, %s222, %s223
      %p227 = pneg %p221
      %p228 = scmp.eq.s32.totalorder %s18, 1
      %p229 = por %p227, %p228
      %p230 = scmp.ne.s32.totalorder %s222, %s225
      %p231 = scmp.eq.s32.totalorder %s18, 0
      %p232 = por %p230, %p231
      %p233 = scmp.ne.s32.totalorder %s222, %s225
      %p234 = scmp.eq.s32.totalorder %s23, 1
      %p235 = por %p233, %p234
      %p236 = scmp.ne.s32.totalorder %s225, %s226
      %p237 = scmp.eq.s32.totalorder %s23, 0
      %p238 = por %p236, %p237
      %p239 = scmp.ne.s32.totalorder %s225, %s226
      %p240 = scmp.eq.s32.totalorder %s24, 1
      %p241 = por %p239, %p240
      %p243 = scmp.ne.s32.totalorder %s226, %s242
      %p244 = scmp.eq.s32.totalorder %s24, 0
      %p245 = por %p243, %p244
      %p246 = scmp.le.s32.totalorder 1, %s18
      %p247 = scmp.lt.s32.totalorder %s18, 3
      %p248 = pnand %p246, %p247
      %p249 = pneg %p248
      // Predicated region
      $region9: #{tpu_custom_call.1} parent=5 // pred_check
        _
      $region10: #{tpu_custom_call.1} parent=5 // pred_check_branch
        %251 = sbr.rel (%p248) target = $region12
      $region11: #{tpu_custom_call.1} parent=5 // pred_region
        %s252 = ssub.s32 %s18, 1
        // Predicated region
        $region13: #{tpu_custom_call.1} parent=11 // pred_check
          %p253 = pneg %p65
        $region14: #{tpu_custom_call.1} parent=11 // pred_check_branch
          %255 = sbr.rel (%p253) target = $region16
        $region15: #{tpu_custom_call.1} parent=11 // pred_region
          _
        $region16: #{tpu_custom_call.1} parent=11 // pred_fallthru
          _
        // Predicated region
        $region17: #{tpu_custom_call.1} parent=11 // pred_check
          %p256 = pneg %p86
        $region18: #{tpu_custom_call.1} parent=11 // pred_check_branch
          %258 = sbr.rel (%p256) target = $region20
        $region19: #{tpu_custom_call.1} parent=11 // pred_region
          _
        $region20: #{tpu_custom_call.1} parent=11 // pred_fallthru
          _
        // Predicated region
        $region21: #{tpu_custom_call.1} parent=11 // pred_check
          %p259 = pneg %p107
        $region22: #{tpu_custom_call.1} parent=11 // pred_check_branch
          %261 = sbr.rel (%p259) target = $region24
        $region23: #{tpu_custom_call.1} parent=11 // pred_region
          _
        $region24: #{tpu_custom_call.1} parent=11 // pred_fallthru
          _
        // Predicated region
        $region25: #{tpu_custom_call.1} parent=11 // pred_check
          %p262 = pneg %p128
        $region26: #{tpu_custom_call.1} parent=11 // pred_check_branch
          %264 = sbr.rel (%p262) target = $region28
        $region27: #{tpu_custom_call.1} parent=11 // pred_region
          _
        $region28: #{tpu_custom_call.1} parent=11 // pred_fallthru
          _
        // Predicated region
        $region29: #{tpu_custom_call.1} parent=11 // pred_check
          %p265 = pneg %p149
        $region30: #{tpu_custom_call.1} parent=11 // pred_check_branch
          %267 = sbr.rel (%p265) target = $region32
        $region31: #{tpu_custom_call.1} parent=11 // pred_region
          _
        $region32: #{tpu_custom_call.1} parent=11 // pred_fallthru
          _
        // Predicated region
        $region33: #{tpu_custom_call.1} parent=11 // pred_check
          %p268 = pneg %p170
        $region34: #{tpu_custom_call.1} parent=11 // pred_check_branch
          %270 = sbr.rel (%p268) target = $region36
        $region35: #{tpu_custom_call.1} parent=11 // pred_region
          _
        $region36: #{tpu_custom_call.1} parent=11 // pred_fallthru
          _
        // Predicated region
        $region37: #{tpu_custom_call.1} parent=11 // pred_check
          %p271 = pneg %p191
        $region38: #{tpu_custom_call.1} parent=11 // pred_check_branch
          %273 = sbr.rel (%p271) target = $region40
        $region39: #{tpu_custom_call.1} parent=11 // pred_region
          _
        $region40: #{tpu_custom_call.1} parent=11 // pred_fallthru
          _
        // Predicated region
        $region41: #{tpu_custom_call.1} parent=11 // pred_check
          %p274 = pneg %p212
        $region42: #{tpu_custom_call.1} parent=11 // pred_check_branch
          %276 = sbr.rel (%p274) target = $region44
        $region43: #{tpu_custom_call.1} parent=11 // pred_region
          _
        $region44: #{tpu_custom_call.1} parent=11 // pred_fallthru
          _
      $region12: #{tpu_custom_call.1} parent=5 // pred_fallthru
        _
      %p277 = scmp.lt.s32.totalorder %s18, 2
      // Predicated region
      $region45: #{tpu_custom_call.1} parent=5 // pred_check
        %p278 = pneg %p277
      $region46: #{tpu_custom_call.1} parent=5 // pred_check_branch
        %280 = sbr.rel (%p278) target = $region48
      $region47: #{tpu_custom_call.1} parent=5 // pred_region
        // Predicated region
        $region49: #{tpu_custom_call.1} parent=47 // pred_check
          %p281 = pneg %p38
        $region50: #{tpu_custom_call.1} parent=47 // pred_check_branch
          %283 = sbr.rel (%p281) target = $region52
        $region51: #{tpu_custom_call.1} parent=47 // pred_region
          %s284 = sand.u32 %s28, 1
          %s285 = sand.u32 %s28, 1
          %s286 = smul.addr %s285, 128
          %s287 = scalar_lea.vmem [#allocation2], %s286
          %s288 = smul.u32 8, %s18
          %s289 = smul.addr %s288, 4
          %s290 = scalar_lea.vmem %s0, %s289
          // Predicated region
          $region53: #{tpu_custom_call.1} parent=51 // pred_check
            _
          $region54: #{tpu_custom_call.1} parent=51 // pred_check_branch
            %292 = sbr.rel (0) target = $region56
          $region55: #{tpu_custom_call.1} parent=51 // pred_region
            // Predicated region
            $region57: #{tpu_custom_call.1} parent=55 // pred_check
              _
            $region58: #{tpu_custom_call.1} parent=55 // pred_check_branch
              %294 = sbr.rel (0) target = $region60
            $region59: #{tpu_custom_call.1} parent=55 // pred_region
              loop: start=0, step=1, limit=1
              $region61: #{tpu_custom_call.1} parent=59 // loop_pre_header
                _
              $region62: #{tpu_custom_call.1} parent=59 // loop_header
                %s296 = sphi 0, %s300
                %p297 = scmp.ge.s32.totalorder %s296, 1
                %s301 = sphi %s290, %s290
                %s302 = sphi %s287, %s287
              $region63: #{tpu_custom_call.1} parent=59 // loop_header_branch
                %299 = sbr.rel (%p297) target = $region67
              $region64: #{tpu_custom_call.1} parent=59 // loop_body
                %v303 = vld [vmem:[%s301] sm:$0xff]
                %304 = vst [vmem:[%s302] sm:$0xff] %v303
                %v305 = vld [vmem:[%s301 + $0x8] sm:$0xff]
                %306 = vst [vmem:[%s302 + $0x8] sm:$0xff] %v305
                %v307 = vld [vmem:[%s301 + $0x10] sm:$0xff]
                %308 = vst [vmem:[%s302 + $0x10] sm:$0xff] %v307
                %v309 = vld [vmem:[%s301 + $0x18] sm:$0xff]
                %310 = vst [vmem:[%s302 + $0x18] sm:$0xff] %v309
                %v311 = vld [vmem:[%s301 + $0x40] sm:$0xff]
                %312 = vst [vmem:[%s302 + $0x20] sm:$0xff] %v311
                %v313 = vld [vmem:[%s301 + $0x48] sm:$0xff]
                %314 = vst [vmem:[%s302 + $0x28] sm:$0xff] %v313
                %v315 = vld [vmem:[%s301 + $0x50] sm:$0xff]
                %316 = vst [vmem:[%s302 + $0x30] sm:$0xff] %v315
                %v317 = vld [vmem:[%s301 + $0x58] sm:$0xff]
                %318 = vst [vmem:[%s302 + $0x38] sm:$0xff] %v317
                %v319 = vld [vmem:[%s301 + $0x80] sm:$0xff]
                %320 = vst [vmem:[%s302 + $0x40] sm:$0xff] %v319
                %v321 = vld [vmem:[%s301 + $0x88] sm:$0xff]
                %322 = vst [vmem:[%s302 + $0x48] sm:$0xff] %v321
                %v323 = vld [vmem:[%s301 + $0x90] sm:$0xff]
                %324 = vst [vmem:[%s302 + $0x50] sm:$0xff] %v323
                %v325 = vld [vmem:[%s301 + $0x98] sm:$0xff]
                %326 = vst [vmem:[%s302 + $0x58] sm:$0xff] %v325
                %v327 = vld [vmem:[%s301 + $0xc0] sm:$0xff]
                %328 = vst [vmem:[%s302 + $0x60] sm:$0xff] %v327
                %v329 = vld [vmem:[%s301 + $0xc8] sm:$0xff]
                %330 = vst [vmem:[%s302 + $0x68] sm:$0xff] %v329
                %v331 = vld [vmem:[%s301 + $0xd0] sm:$0xff]
                %332 = vst [vmem:[%s302 + $0x70] sm:$0xff] %v331
                %v333 = vld [vmem:[%s301 + $0xd8] sm:$0xff]
                %334 = vst [vmem:[%s302 + $0x78] sm:$0xff] %v333
              $region65: #{tpu_custom_call.1} parent=59 // loop_footer
                %s300 = sadd.s32 1, %s296
              $region66: #{tpu_custom_call.1} parent=59 // loop_footer_branch
                %295 = sbr.rel target = $region62
              $region67: #{tpu_custom_call.1} parent=59 // loop_exit
                _
            $region60: #{tpu_custom_call.1} parent=55 // pred_fallthru
              _
            // Predicated region
            $region68: #{tpu_custom_call.1} parent=55 // pred_check
              _
            $region69: #{tpu_custom_call.1} parent=55 // pred_check_branch
              %336 = sbr.rel target = $region71
            $region70: #{tpu_custom_call.1} parent=55 // pred_region
              _
            $region71: #{tpu_custom_call.1} parent=55 // pred_fallthru
              _
          $region56: #{tpu_custom_call.1} parent=51 // pred_fallthru
            _
          %337 = vnop
        $region52: #{tpu_custom_call.1} parent=47 // pred_fallthru
          _
      $region48: #{tpu_custom_call.1} parent=5 // pred_fallthru
        _
      %p338 = scmp.le.s32.totalorder 1, %s18
      %p339 = scmp.lt.s32.totalorder %s18, 3
      %p340 = pnand %p338, %p339
      %p341 = pneg %p340
      // Predicated region
      $region72: #{tpu_custom_call.1} parent=5 // pred_check
        _
      $region73: #{tpu_custom_call.1} parent=5 // pred_check_branch
        %343 = sbr.rel (%p340) target = $region75
      $region74: #{tpu_custom_call.1} parent=5 // pred_region
        %s344 = ssub.s32 %s18, 1
        %s345 = sand.u32 %s31, 1
        %s346 = sand.u32 %s31, 1
        %s347 = smul.addr %s346, 128
        %s348 = scalar_lea.vmem [#allocation2], %s347
        // Predicated region
        $region76: #{tpu_custom_call.1} parent=74 // pred_check
          %p349 = pneg %p44
        $region77: #{tpu_custom_call.1} parent=74 // pred_check_branch
          %351 = sbr.rel (%p349) target = $region79
        $region78: #{tpu_custom_call.1} parent=74 // pred_region
          _
        $region79: #{tpu_custom_call.1} parent=74 // pred_fallthru
          _
        %s352 = sand.u32 %s31, 1
        %s353 = sand.u32 %s31, 1
        %s354 = smul.addr %s353, 128
        %s355 = scalar_lea.vmem [#allocation2], %s354
        %p356 = pneg %p44
        %p357 = pneg %p41
        %p358 = pneg %p65
        %p359 = pneg %p62
        %p360 = pneg %p86
        %p361 = pneg %p83
        %p362 = pneg %p107
        %p363 = pneg %p104
        %p364 = pneg %p128
        %p365 = pneg %p125
        %p366 = pneg %p149
        %p367 = pneg %p146
        %p368 = pneg %p170
        %p369 = pneg %p167
        %p370 = pneg %p191
        %p371 = pneg %p188
        %p372 = pneg %p212
        %p373 = pneg %p209
        %p374 = pneg %p238
        %p375 = pneg %p235
        %s376 = sand.u32 %s225, 1
        %s377 = scalar_lea.sflag [#allocation4], %s376
        %s378 = sand.u32 %s225, 1
        %s379 = smul.addr %s378, 8
        %s380 = scalar_lea.vmem [#allocation3], %s379
        %s381 = smul.u32 8, %s23
        %v383 = vld [vmem:[%s1] sm:$0xf]
        %v384 = vld [vmem:[%s1 + $0x4] sm:$0xf]
        %v385 = vld [vmem:[%s348] sm:$0xff]
        %v386 = vld [vmem:[%s348 + $0x8] sm:$0xff]
        %v387 = vld [vmem:[%s348 + $0x10] sm:$0xff]
        %v388 = vld [vmem:[%s348 + $0x18] sm:$0xff]
        %v389 = vld [vmem:[%s348 + $0x20] sm:$0xff]
        %v390 = vld [vmem:[%s348 + $0x28] sm:$0xff]
        %v391 = vld [vmem:[%s348 + $0x30] sm:$0xff]
        %v392 = vld [vmem:[%s348 + $0x38] sm:$0xff]
        %v393 = vld [vmem:[%s348 + $0x40] sm:$0xff]
        %v394 = vld [vmem:[%s348 + $0x48] sm:$0xff]
        %v395 = vld [vmem:[%s348 + $0x50] sm:$0xff]
        %v396 = vld [vmem:[%s348 + $0x58] sm:$0xff]
        %v397 = vld [vmem:[%s348 + $0x60] sm:$0xff]
        %v398 = vld [vmem:[%s348 + $0x68] sm:$0xff]
        %v399 = vld [vmem:[%s348 + $0x70] sm:$0xff]
        %v400 = vld [vmem:[%s348 + $0x78] sm:$0xff]
        %v401 = vld [vmem:[%s2] sm:$0xff]
        %v402 = vld [vmem:[%s2 + $0x8] sm:$0xff]
        %404 = vset.pattern.permute.xlu0 0
        %405 = vperm.xlu0 %404, %v401
        %v406 = vpop.permute.xlu0 %405
        %409 = vset.pattern.permute.xlu0 0
        %410 = vperm.xlu0 %409, %v402
        %v411 = vpop.permute.xlu0 %410
        %v415 = vunpack.c.l.b16 %v383
        %v416 = vunpack.c.l.b16 %v384
        %v417 = vpack.c.b16 %v416, %v415
        %v434 = vunpack.c.l.b16 %v385
        %v435 = vunpack.c.h.b16 %v385
        %v436 = vunpack.c.l.b16 %v386
        %v437 = vunpack.c.h.b16 %v386
        %v438 = vunpack.c.l.b16 %v387
        %v439 = vunpack.c.h.b16 %v387
        %v440 = vunpack.c.l.b16 %v388
        %v441 = vunpack.c.h.b16 %v388
        %v442 = vunpack.c.l.b16 %v389
        %v443 = vunpack.c.h.b16 %v389
        %v444 = vunpack.c.l.b16 %v390
        %v445 = vunpack.c.h.b16 %v390
        %v446 = vunpack.c.l.b16 %v391
        %v447 = vunpack.c.h.b16 %v391
        %v448 = vunpack.c.l.b16 %v392
        %v449 = vunpack.c.h.b16 %v392
        %v450 = vunpack.c.l.b16 %v393
        %v451 = vunpack.c.h.b16 %v393
        %v452 = vunpack.c.l.b16 %v394
        %v453 = vunpack.c.h.b16 %v394
        %v454 = vunpack.c.l.b16 %v395
        %v455 = vunpack.c.h.b16 %v395
        %v456 = vunpack.c.l.b16 %v396
        %v457 = vunpack.c.h.b16 %v396
        %v458 = vunpack.c.l.b16 %v397
        %v459 = vunpack.c.h.b16 %v397
        %v460 = vunpack.c.l.b16 %v398
        %v461 = vunpack.c.h.b16 %v398
        %v462 = vunpack.c.l.b16 %v399
        %v463 = vunpack.c.h.b16 %v399
        %v464 = vunpack.c.l.b16 %v400
        %v465 = vunpack.c.h.b16 %v400
        %v466 = vpack.c.b16 %v442, %v434
        %v467 = vpack.c.b16 %v443, %v435
        %v468 = vpack.c.b16 %v444, %v436
        %v469 = vpack.c.b16 %v445, %v437
        %v470 = vpack.c.b16 %v446, %v438
        %v471 = vpack.c.b16 %v447, %v439
        %v472 = vpack.c.b16 %v448, %v440
        %v473 = vpack.c.b16 %v449, %v441
        %v474 = vpack.c.b16 %v458, %v450
        %v475 = vpack.c.b16 %v459, %v451
        %v476 = vpack.c.b16 %v460, %v452
        %v477 = vpack.c.b16 %v461, %v453
        %v478 = vpack.c.b16 %v462, %v454
        %v479 = vpack.c.b16 %v463, %v455
        %v480 = vpack.c.b16 %v464, %v456
        %v481 = vpack.c.b16 %v465, %v457
        %vm498 = vcmask 261120
        %v500 = vsel %vm498, %v417, 0
        %502 = vmatpush.bf16.msra.mxu0 0
        %503 = vmatpush.bf16.msra.mxu0 0
        %504 = vmatpush.bf16.msra.mxu0 0
        %505 = vmatpush.bf16.msra.mxu0 0
        %506 = vmatpush.bf16.msra.mxu0 0
        %507 = vmatpush.bf16.msra.mxu0 0
        %508 = vmatpush.bf16.msra.mxu0 %v474
        %509 = vmatpush.bf16.msra.mxu0 %v466
        %510 = vmatmul.bf16.gmra.mxu0 %v500
        %v511 = vpop.f32.mrf.mxu0
        %v512 = vadd.f32 %v406, %v511
        %v513 = vpop.f32.mrf.mxu0
        %v514 = vadd.f32 %v411, %v513
        %515 = vdwg.mxu0
        %516 = vmatpush.bf16.msra.mxu0 0
        %517 = vmatpush.bf16.msra.mxu0 0
        %518 = vmatpush.bf16.msra.mxu0 0
        %519 = vmatpush.bf16.msra.mxu0 0
        %520 = vmatpush.bf16.msra.mxu0 0
        %521 = vmatpush.bf16.msra.mxu0 0
        %522 = vmatpush.bf16.msra.mxu0 %v475
        %523 = vmatpush.bf16.msra.mxu0 %v467
        %524 = vmatmul.bf16.gmra.mxu0 %v500
        %v525 = vpop.f32.mrf.mxu0
        %v526 = vadd.f32 %v406, %v525
        %v527 = vpop.f32.mrf.mxu0
        %v528 = vadd.f32 %v411, %v527
        %529 = vdwg.mxu0
        %530 = vmatpush.bf16.msra.mxu0 0
        %531 = vmatpush.bf16.msra.mxu0 0
        %532 = vmatpush.bf16.msra.mxu0 0
        %533 = vmatpush.bf16.msra.mxu0 0
        %534 = vmatpush.bf16.msra.mxu0 0
        %535 = vmatpush.bf16.msra.mxu0 0
        %536 = vmatpush.bf16.msra.mxu0 %v476
        %537 = vmatpush.bf16.msra.mxu0 %v468
        %538 = vmatmul.bf16.gmra.mxu0 %v500
        %v539 = vpop.f32.mrf.mxu0
        %v540 = vadd.f32 %v406, %v539
        %v541 = vpop.f32.mrf.mxu0
        %v542 = vadd.f32 %v411, %v541
        %543 = vdwg.mxu0
        %544 = vmatpush.bf16.msra.mxu0 0
        %545 = vmatpush.bf16.msra.mxu0 0
        %546 = vmatpush.bf16.msra.mxu0 0
        %547 = vmatpush.bf16.msra.mxu0 0
        %548 = vmatpush.bf16.msra.mxu0 0
        %549 = vmatpush.bf16.msra.mxu0 0
        %550 = vmatpush.bf16.msra.mxu0 %v477
        %551 = vmatpush.bf16.msra.mxu0 %v469
        %552 = vmatmul.bf16.gmra.mxu0 %v500
        %v553 = vpop.f32.mrf.mxu0
        %v554 = vadd.f32 %v406, %v553
        %v555 = vpop.f32.mrf.mxu0
        %v556 = vadd.f32 %v411, %v555
        %557 = vdwg.mxu0
        %558 = vmatpush.bf16.msra.mxu0 0
        %559 = vmatpush.bf16.msra.mxu0 0
        %560 = vmatpush.bf16.msra.mxu0 0
        %561 = vmatpush.bf16.msra.mxu0 0
        %562 = vmatpush.bf16.msra.mxu0 0
        %563 = vmatpush.bf16.msra.mxu0 0
        %564 = vmatpush.bf16.msra.mxu0 %v478
        %565 = vmatpush.bf16.msra.mxu0 %v470
        %566 = vmatmul.bf16.gmra.mxu0 %v500
        %v567 = vpop.f32.mrf.mxu0
        %v568 = vadd.f32 %v406, %v567
        %v569 = vpop.f32.mrf.mxu0
        %v570 = vadd.f32 %v411, %v569
        %571 = vdwg.mxu0
        %572 = vmatpush.bf16.msra.mxu0 0
        %573 = vmatpush.bf16.msra.mxu0 0
        %574 = vmatpush.bf16.msra.mxu0 0
        %575 = vmatpush.bf16.msra.mxu0 0
        %576 = vmatpush.bf16.msra.mxu0 0
        %577 = vmatpush.bf16.msra.mxu0 0
        %578 = vmatpush.bf16.msra.mxu0 %v479
        %579 = vmatpush.bf16.msra.mxu0 %v471
        %580 = vmatmul.bf16.gmra.mxu0 %v500
        %v581 = vpop.f32.mrf.mxu0
        %v582 = vadd.f32 %v406, %v581
        %v583 = vpop.f32.mrf.mxu0
        %v584 = vadd.f32 %v411, %v583
        %585 = vdwg.mxu0
        %586 = vmatpush.bf16.msra.mxu0 0
        %587 = vmatpush.bf16.msra.mxu0 0
        %588 = vmatpush.bf16.msra.mxu0 0
        %589 = vmatpush.bf16.msra.mxu0 0
        %590 = vmatpush.bf16.msra.mxu0 0
        %591 = vmatpush.bf16.msra.mxu0 0
        %592 = vmatpush.bf16.msra.mxu0 %v480
        %593 = vmatpush.bf16.msra.mxu0 %v472
        %594 = vmatmul.bf16.gmra.mxu0 %v500
        %v595 = vpop.f32.mrf.mxu0
        %v596 = vadd.f32 %v406, %v595
        %v597 = vpop.f32.mrf.mxu0
        %v598 = vadd.f32 %v411, %v597
        %599 = vdwg.mxu0
        %600 = vmatpush.bf16.msra.mxu0 0
        %601 = vmatpush.bf16.msra.mxu0 0
        %602 = vmatpush.bf16.msra.mxu0 0
        %603 = vmatpush.bf16.msra.mxu0 0
        %604 = vmatpush.bf16.msra.mxu0 0
        %605 = vmatpush.bf16.msra.mxu0 0
        %606 = vmatpush.bf16.msra.mxu0 %v481
        %607 = vmatpush.bf16.msra.mxu0 %v473
        %608 = vmatmul.bf16.gmra.mxu0 %v500
        %v609 = vpop.f32.mrf.mxu0
        %v610 = vadd.f32 %v406, %v609
        %v611 = vpop.f32.mrf.mxu0
        %v612 = vadd.f32 %v411, %v611
        %613 = vdwg.mxu0
        %vm614 = vcmp.gt.f32.partialorder %v512, 0.0
        %vm615 = vcmp.gt.f32.partialorder %v526, 0.0
        %vm616 = vcmp.gt.f32.partialorder %v540, 0.0
        %vm617 = vcmp.gt.f32.partialorder %v554, 0.0
        %vm618 = vcmp.gt.f32.partialorder %v568, 0.0
        %vm619 = vcmp.gt.f32.partialorder %v582, 0.0
        %vm620 = vcmp.gt.f32.partialorder %v596, 0.0
        %vm621 = vcmp.gt.f32.partialorder %v610, 0.0
        %vm622 = vcmp.gt.f32.partialorder %v514, 0.0
        %vm623 = vcmp.gt.f32.partialorder %v528, 0.0
        %vm624 = vcmp.gt.f32.partialorder %v542, 0.0
        %vm625 = vcmp.gt.f32.partialorder %v556, 0.0
        %vm626 = vcmp.gt.f32.partialorder %v570, 0.0
        %vm627 = vcmp.gt.f32.partialorder %v584, 0.0
        %vm628 = vcmp.gt.f32.partialorder %v598, 0.0
        %vm629 = vcmp.gt.f32.partialorder %v612, 0.0
        %v630 = vmin.f32 %v512, 0.0
        %v631 = vmin.f32 %v526, 0.0
        %v632 = vmin.f32 %v540, 0.0
        %v633 = vmin.f32 %v554, 0.0
        %v634 = vmin.f32 %v568, 0.0
        %v635 = vmin.f32 %v582, 0.0
        %v636 = vmin.f32 %v596, 0.0
        %v637 = vmin.f32 %v610, 0.0
        %v638 = vmin.f32 %v514, 0.0
        %v639 = vmin.f32 %v528, 0.0
        %v640 = vmin.f32 %v542, 0.0
        %v641 = vmin.f32 %v556, 0.0
        %v642 = vmin.f32 %v570, 0.0
        %v643 = vmin.f32 %v584, 0.0
        %v644 = vmin.f32 %v598, 0.0
        %v645 = vmin.f32 %v612, 0.0
        %v646 = vmul.f32 %v630, 1.442695
        %v647 = vpow.pop %v646
        %v648 = vmul.f32 %v631, 1.442695
        %v649 = vpow.pop %v648
        %v650 = vmul.f32 %v632, 1.442695
        %v651 = vpow.pop %v650
        %v652 = vmul.f32 %v633, 1.442695
        %v653 = vpow.pop %v652
        %v654 = vmul.f32 %v634, 1.442695
        %v655 = vpow.pop %v654
        %v656 = vmul.f32 %v635, 1.442695
        %v657 = vpow.pop %v656
        %v658 = vmul.f32 %v636, 1.442695
        %v659 = vpow.pop %v658
        %v660 = vmul.f32 %v637, 1.442695
        %v661 = vpow.pop %v660
        %v662 = vmul.f32 %v638, 1.442695
        %v663 = vpow.pop %v662
        %v664 = vmul.f32 %v639, 1.442695
        %v665 = vpow.pop %v664
        %v666 = vmul.f32 %v640, 1.442695
        %v667 = vpow.pop %v666
        %v668 = vmul.f32 %v641, 1.442695
        %v669 = vpow.pop %v668
        %v670 = vmul.f32 %v642, 1.442695
        %v671 = vpow.pop %v670
        %v672 = vmul.f32 %v643, 1.442695
        %v673 = vpow.pop %v672
        %v674 = vmul.f32 %v644, 1.442695
        %v675 = vpow.pop %v674
        %v676 = vmul.f32 %v645, 1.442695
        %v677 = vpow.pop %v676
        %v678 = vsub.f32 %v647, 1.0
        %v679 = vsub.f32 %v649, 1.0
        %v680 = vsub.f32 %v651, 1.0
        %v681 = vsub.f32 %v653, 1.0
        %v682 = vsub.f32 %v655, 1.0
        %v683 = vsub.f32 %v657, 1.0
        %v684 = vsub.f32 %v659, 1.0
        %v685 = vsub.f32 %v661, 1.0
        %v686 = vsub.f32 %v663, 1.0
        %v687 = vsub.f32 %v665, 1.0
        %v688 = vsub.f32 %v667, 1.0
        %v689 = vsub.f32 %v669, 1.0
        %v690 = vsub.f32 %v671, 1.0
        %v691 = vsub.f32 %v673, 1.0
        %v692 = vsub.f32 %v675, 1.0
        %v693 = vsub.f32 %v677, 1.0
        %v694 = vsel %vm614, %v512, %v678
        %v695 = vsel %vm615, %v526, %v679
        %v696 = vsel %vm616, %v540, %v680
        %v697 = vsel %vm617, %v554, %v681
        %v698 = vsel %vm618, %v568, %v682
        %v699 = vsel %vm619, %v582, %v683
        %v700 = vsel %vm620, %v596, %v684
        %v701 = vsel %vm621, %v610, %v685
        %v702 = vsel %vm622, %v514, %v686
        %v703 = vsel %vm623, %v528, %v687
        %v704 = vsel %vm624, %v542, %v688
        %v705 = vsel %vm625, %v556, %v689
        %v706 = vsel %vm626, %v570, %v690
        %v707 = vsel %vm627, %v584, %v691
        %v708 = vsel %vm628, %v598, %v692
        %v709 = vsel %vm629, %v612, %v693
        %v710 = vld [vmem:[%s3] sm:$0xff]
        %v711 = vld [vmem:[%s3 + $0x8] sm:$0xff]
        %v712 = vld [vmem:[%s3 + $0x10] sm:$0xff]
        %v713 = vld [vmem:[%s3 + $0x18] sm:$0xff]
        %v714 = vld [vmem:[%s3 + $0x20] sm:$0xff]
        %v715 = vld [vmem:[%s3 + $0x28] sm:$0xff]
        %v716 = vld [vmem:[%s3 + $0x30] sm:$0xff]
        %v717 = vld [vmem:[%s3 + $0x38] sm:$0xff]
        %v718 = vld [vmem:[%s3 + $0x40] sm:$0xff]
        %v719 = vld [vmem:[%s3 + $0x48] sm:$0xff]
        %v720 = vld [vmem:[%s3 + $0x50] sm:$0xff]
        %v721 = vld [vmem:[%s3 + $0x58] sm:$0xff]
        %v722 = vld [vmem:[%s3 + $0x60] sm:$0xff]
        %v723 = vld [vmem:[%s3 + $0x68] sm:$0xff]
        %v724 = vld [vmem:[%s3 + $0x70] sm:$0xff]
        %v725 = vld [vmem:[%s3 + $0x78] sm:$0xff]
        %v726 = vld [vmem:[%s3 + $0x80] sm:$0xff]
        %v727 = vld [vmem:[%s3 + $0x88] sm:$0xff]
        %v728 = vld [vmem:[%s3 + $0x90] sm:$0xff]
        %v729 = vld [vmem:[%s3 + $0x98] sm:$0xff]
        %v730 = vld [vmem:[%s3 + $0xa0] sm:$0xff]
        %v731 = vld [vmem:[%s3 + $0xa8] sm:$0xff]
        %v732 = vld [vmem:[%s3 + $0xb0] sm:$0xff]
        %v733 = vld [vmem:[%s3 + $0xb8] sm:$0xff]
        %v734 = vld [vmem:[%s3 + $0xc0] sm:$0xff]
        %v735 = vld [vmem:[%s3 + $0xc8] sm:$0xff]
        %v736 = vld [vmem:[%s3 + $0xd0] sm:$0xff]
        %v737 = vld [vmem:[%s3 + $0xd8] sm:$0xff]
        %v738 = vld [vmem:[%s3 + $0xe0] sm:$0xff]
        %v739 = vld [vmem:[%s3 + $0xe8] sm:$0xff]
        %v740 = vld [vmem:[%s3 + $0xf0] sm:$0xff]
        %v741 = vld [vmem:[%s3 + $0xf8] sm:$0xff]
        %v742 = vld [vmem:[%s3 + $0x100] sm:$0xff]
        %v743 = vld [vmem:[%s3 + $0x108] sm:$0xff]
        %v744 = vld [vmem:[%s3 + $0x110] sm:$0xff]
        %v745 = vld [vmem:[%s3 + $0x118] sm:$0xff]
        %v746 = vld [vmem:[%s3 + $0x120] sm:$0xff]
        %v747 = vld [vmem:[%s3 + $0x128] sm:$0xff]
        %v748 = vld [vmem:[%s3 + $0x130] sm:$0xff]
        %v749 = vld [vmem:[%s3 + $0x138] sm:$0xff]
        %v750 = vld [vmem:[%s3 + $0x140] sm:$0xff]
        %v751 = vld [vmem:[%s3 + $0x148] sm:$0xff]
        %v752 = vld [vmem:[%s3 + $0x150] sm:$0xff]
        %v753 = vld [vmem:[%s3 + $0x158] sm:$0xff]
        %v754 = vld [vmem:[%s3 + $0x160] sm:$0xff]
        %v755 = vld [vmem:[%s3 + $0x168] sm:$0xff]
        %v756 = vld [vmem:[%s3 + $0x170] sm:$0xff]
        %v757 = vld [vmem:[%s3 + $0x178] sm:$0xff]
        %v758 = vld [vmem:[%s3 + $0x180] sm:$0xff]
        %v759 = vld [vmem:[%s3 + $0x188] sm:$0xff]
        %v760 = vld [vmem:[%s3 + $0x190] sm:$0xff]
        %v761 = vld [vmem:[%s3 + $0x198] sm:$0xff]
        %v762 = vld [vmem:[%s3 + $0x1a0] sm:$0xff]
        %v763 = vld [vmem:[%s3 + $0x1a8] sm:$0xff]
        %v764 = vld [vmem:[%s3 + $0x1b0] sm:$0xff]
        %v765 = vld [vmem:[%s3 + $0x1b8] sm:$0xff]
        %v766 = vld [vmem:[%s3 + $0x1c0] sm:$0xff]
        %v767 = vld [vmem:[%s3 + $0x1c8] sm:$0xff]
        %v768 = vld [vmem:[%s3 + $0x1d0] sm:$0xff]
        %v769 = vld [vmem:[%s3 + $0x1d8] sm:$0xff]
        %v770 = vld [vmem:[%s3 + $0x1e0] sm:$0xff]
        %v771 = vld [vmem:[%s3 + $0x1e8] sm:$0xff]
        %v772 = vld [vmem:[%s3 + $0x1f0] sm:$0xff]
        %v773 = vld [vmem:[%s3 + $0x1f8] sm:$0xff]
        %v774 = vld [vmem:[%s3 + $0x200] sm:$0xff]
        %v775 = vld [vmem:[%s3 + $0x208] sm:$0xff]
        %v776 = vld [vmem:[%s3 + $0x210] sm:$0xff]
        %v777 = vld [vmem:[%s3 + $0x218] sm:$0xff]
        %v778 = vld [vmem:[%s3 + $0x220] sm:$0xff]
        %v779 = vld [vmem:[%s3 + $0x228] sm:$0xff]
        %v780 = vld [vmem:[%s3 + $0x230] sm:$0xff]
        %v781 = vld [vmem:[%s3 + $0x238] sm:$0xff]
        %v782 = vld [vmem:[%s3 + $0x240] sm:$0xff]
        %v783 = vld [vmem:[%s3 + $0x248] sm:$0xff]
        %v784 = vld [vmem:[%s3 + $0x250] sm:$0xff]
        %v785 = vld [vmem:[%s3 + $0x258] sm:$0xff]
        %v786 = vld [vmem:[%s3 + $0x260] sm:$0xff]
        %v787 = vld [vmem:[%s3 + $0x268] sm:$0xff]
        %v788 = vld [vmem:[%s3 + $0x270] sm:$0xff]
        %v789 = vld [vmem:[%s3 + $0x278] sm:$0xff]
        %v790 = vld [vmem:[%s3 + $0x280] sm:$0xff]
        %v791 = vld [vmem:[%s3 + $0x288] sm:$0xff]
        %v792 = vld [vmem:[%s3 + $0x290] sm:$0xff]
        %v793 = vld [vmem:[%s3 + $0x298] sm:$0xff]
        %v794 = vld [vmem:[%s3 + $0x2a0] sm:$0xff]
        %v795 = vld [vmem:[%s3 + $0x2a8] sm:$0xff]
        %v796 = vld [vmem:[%s3 + $0x2b0] sm:$0xff]
        %v797 = vld [vmem:[%s3 + $0x2b8] sm:$0xff]
        %v798 = vld [vmem:[%s3 + $0x2c0] sm:$0xff]
        %v799 = vld [vmem:[%s3 + $0x2c8] sm:$0xff]
        %v800 = vld [vmem:[%s3 + $0x2d0] sm:$0xff]
        %v801 = vld [vmem:[%s3 + $0x2d8] sm:$0xff]
        %v802 = vld [vmem:[%s3 + $0x2e0] sm:$0xff]
        %v803 = vld [vmem:[%s3 + $0x2e8] sm:$0xff]
        %v804 = vld [vmem:[%s3 + $0x2f0] sm:$0xff]
        %v805 = vld [vmem:[%s3 + $0x2f8] sm:$0xff]
        %v806 = vld [vmem:[%s3 + $0x300] sm:$0xff]
        %v807 = vld [vmem:[%s3 + $0x308] sm:$0xff]
        %v808 = vld [vmem:[%s3 + $0x310] sm:$0xff]
        %v809 = vld [vmem:[%s3 + $0x318] sm:$0xff]
        %v810 = vld [vmem:[%s3 + $0x320] sm:$0xff]
        %v811 = vld [vmem:[%s3 + $0x328] sm:$0xff]
        %v812 = vld [vmem:[%s3 + $0x330] sm:$0xff]
        %v813 = vld [vmem:[%s3 + $0x338] sm:$0xff]
        %v814 = vld [vmem:[%s3 + $0x340] sm:$0xff]
        %v815 = vld [vmem:[%s3 + $0x348] sm:$0xff]
        %v816 = vld [vmem:[%s3 + $0x350] sm:$0xff]
        %v817 = vld [vmem:[%s3 + $0x358] sm:$0xff]
        %v818 = vld [vmem:[%s3 + $0x360] sm:$0xff]
        %v819 = vld [vmem:[%s3 + $0x368] sm:$0xff]
        %v820 = vld [vmem:[%s3 + $0x370] sm:$0xff]
        %v821 = vld [vmem:[%s3 + $0x378] sm:$0xff]
        %v822 = vld [vmem:[%s3 + $0x380] sm:$0xff]
        %v823 = vld [vmem:[%s3 + $0x388] sm:$0xff]
        %v824 = vld [vmem:[%s3 + $0x390] sm:$0xff]
        %v825 = vld [vmem:[%s3 + $0x398] sm:$0xff]
        %v826 = vld [vmem:[%s3 + $0x3a0] sm:$0xff]
        %v827 = vld [vmem:[%s3 + $0x3a8] sm:$0xff]
        %v828 = vld [vmem:[%s3 + $0x3b0] sm:$0xff]
        %v829 = vld [vmem:[%s3 + $0x3b8] sm:$0xff]
        %v830 = vld [vmem:[%s3 + $0x3c0] sm:$0xff]
        %v831 = vld [vmem:[%s3 + $0x3c8] sm:$0xff]
        %v832 = vld [vmem:[%s3 + $0x3d0] sm:$0xff]
        %v833 = vld [vmem:[%s3 + $0x3d8] sm:$0xff]
        %v834 = vld [vmem:[%s3 + $0x3e0] sm:$0xff]
        %v835 = vld [vmem:[%s3 + $0x3e8] sm:$0xff]
        %v836 = vld [vmem:[%s3 + $0x3f0] sm:$0xff]
        %v837 = vld [vmem:[%s3 + $0x3f8] sm:$0xff]
        %838 = vmatpush.msra.mxu0 %v725
        %839 = vmatpush.msra.mxu0 %v724
        %840 = vmatpush.msra.mxu0 %v723
        %841 = vmatpush.msra.mxu0 %v722
        %842 = vmatpush.msra.mxu0 %v721
        %843 = vmatpush.msra.mxu0 %v720
        %844 = vmatpush.msra.mxu0 %v719
        %845 = vmatpush.msra.mxu0 %v718
        %846 = vmatpush.msra.mxu0 %v717
        %847 = vmatpush.msra.mxu0 %v716
        %848 = vmatpush.msra.mxu0 %v715
        %849 = vmatpush.msra.mxu0 %v714
        %850 = vmatpush.msra.mxu0 %v713
        %851 = vmatpush.msra.mxu0 %v712
        %852 = vmatpush.msra.mxu0 %v711
        %853 = vmatpush.msra.mxu0 %v710
        %854 = vmatmul.f32.gmra.mxu0 %v694
        %v855 = vpop.f32.mrf.mxu0
        %v856 = vadd.f32 0.0, %v855
        %857 = vmatmul.f32.gmra.mxu0 %v702
        %v858 = vpop.f32.mrf.mxu0
        %v859 = vadd.f32 0.0, %v858
        %860 = vdwg.mxu0
        %861 = vmatpush.msra.mxu0 %v741
        %862 = vmatpush.msra.mxu0 %v740
        %863 = vmatpush.msra.mxu0 %v739
        %864 = vmatpush.msra.mxu0 %v738
        %865 = vmatpush.msra.mxu0 %v737
        %866 = vmatpush.msra.mxu0 %v736
        %867 = vmatpush.msra.mxu0 %v735
        %868 = vmatpush.msra.mxu0 %v734
        %869 = vmatpush.msra.mxu0 %v733
        %870 = vmatpush.msra.mxu0 %v732
        %871 = vmatpush.msra.mxu0 %v731
        %872 = vmatpush.msra.mxu0 %v730
        %873 = vmatpush.msra.mxu0 %v729
        %874 = vmatpush.msra.mxu0 %v728
        %875 = vmatpush.msra.mxu0 %v727
        %876 = vmatpush.msra.mxu0 %v726
        %877 = vmatmul.f32.gmra.mxu0 %v695
        %v878 = vpop.f32.mrf.mxu0
        %v879 = vadd.f32 %v856, %v878
        %880 = vmatmul.f32.gmra.mxu0 %v703
        %v881 = vpop.f32.mrf.mxu0
        %v882 = vadd.f32 %v859, %v881
        %883 = vdwg.mxu0
        %884 = vmatpush.msra.mxu0 %v757
        %885 = vmatpush.msra.mxu0 %v756
        %886 = vmatpush.msra.mxu0 %v755
        %887 = vmatpush.msra.mxu0 %v754
        %888 = vmatpush.msra.mxu0 %v753
        %889 = vmatpush.msra.mxu0 %v752
        %890 = vmatpush.msra.mxu0 %v751
        %891 = vmatpush.msra.mxu0 %v750
        %892 = vmatpush.msra.mxu0 %v749
        %893 = vmatpush.msra.mxu0 %v748
        %894 = vmatpush.msra.mxu0 %v747
        %895 = vmatpush.msra.mxu0 %v746
        %896 = vmatpush.msra.mxu0 %v745
        %897 = vmatpush.msra.mxu0 %v744
        %898 = vmatpush.msra.mxu0 %v743
        %899 = vmatpush.msra.mxu0 %v742
        %900 = vmatmul.f32.gmra.mxu0 %v696
        %v901 = vpop.f32.mrf.mxu0
        %v902 = vadd.f32 %v879, %v901
        %903 = vmatmul.f32.gmra.mxu0 %v704
        %v904 = vpop.f32.mrf.mxu0
        %v905 = vadd.f32 %v882, %v904
        %906 = vdwg.mxu0
        %907 = vmatpush.msra.mxu0 %v773
        %908 = vmatpush.msra.mxu0 %v772
        %909 = vmatpush.msra.mxu0 %v771
        %910 = vmatpush.msra.mxu0 %v770
        %911 = vmatpush.msra.mxu0 %v769
        %912 = vmatpush.msra.mxu0 %v768
        %913 = vmatpush.msra.mxu0 %v767
        %914 = vmatpush.msra.mxu0 %v766
        %915 = vmatpush.msra.mxu0 %v765
        %916 = vmatpush.msra.mxu0 %v764
        %917 = vmatpush.msra.mxu0 %v763
        %918 = vmatpush.msra.mxu0 %v762
        %919 = vmatpush.msra.mxu0 %v761
        %920 = vmatpush.msra.mxu0 %v760
        %921 = vmatpush.msra.mxu0 %v759
        %922 = vmatpush.msra.mxu0 %v758
        %923 = vmatmul.f32.gmra.mxu0 %v697
        %v924 = vpop.f32.mrf.mxu0
        %v925 = vadd.f32 %v902, %v924
        %926 = vmatmul.f32.gmra.mxu0 %v705
        %v927 = vpop.f32.mrf.mxu0
        %v928 = vadd.f32 %v905, %v927
        %929 = vdwg.mxu0
        %930 = vmatpush.msra.mxu0 %v789
        %931 = vmatpush.msra.mxu0 %v788
        %932 = vmatpush.msra.mxu0 %v787
        %933 = vmatpush.msra.mxu0 %v786
        %934 = vmatpush.msra.mxu0 %v785
        %935 = vmatpush.msra.mxu0 %v784
        %936 = vmatpush.msra.mxu0 %v783
        %937 = vmatpush.msra.mxu0 %v782
        %938 = vmatpush.msra.mxu0 %v781
        %939 = vmatpush.msra.mxu0 %v780
        %940 = vmatpush.msra.mxu0 %v779
        %941 = vmatpush.msra.mxu0 %v778
        %942 = vmatpush.msra.mxu0 %v777
        %943 = vmatpush.msra.mxu0 %v776
        %944 = vmatpush.msra.mxu0 %v775
        %945 = vmatpush.msra.mxu0 %v774
        %946 = vmatmul.f32.gmra.mxu0 %v698
        %v947 = vpop.f32.mrf.mxu0
        %v948 = vadd.f32 %v925, %v947
        %949 = vmatmul.f32.gmra.mxu0 %v706
        %v950 = vpop.f32.mrf.mxu0
        %v951 = vadd.f32 %v928, %v950
        %952 = vdwg.mxu0
        %953 = vmatpush.msra.mxu0 %v805
        %954 = vmatpush.msra.mxu0 %v804
        %955 = vmatpush.msra.mxu0 %v803
        %956 = vmatpush.msra.mxu0 %v802
        %957 = vmatpush.msra.mxu0 %v801
        %958 = vmatpush.msra.mxu0 %v800
        %959 = vmatpush.msra.mxu0 %v799
        %960 = vmatpush.msra.mxu0 %v798
        %961 = vmatpush.msra.mxu0 %v797
        %962 = vmatpush.msra.mxu0 %v796
        %963 = vmatpush.msra.mxu0 %v795
        %964 = vmatpush.msra.mxu0 %v794
        %965 = vmatpush.msra.mxu0 %v793
        %966 = vmatpush.msra.mxu0 %v792
        %967 = vmatpush.msra.mxu0 %v791
        %968 = vmatpush.msra.mxu0 %v790
        %969 = vmatmul.f32.gmra.mxu0 %v699
        %v970 = vpop.f32.mrf.mxu0
        %v971 = vadd.f32 %v948, %v970
        %972 = vmatmul.f32.gmra.mxu0 %v707
        %v973 = vpop.f32.mrf.mxu0
        %v974 = vadd.f32 %v951, %v973
        %975 = vdwg.mxu0
        %976 = vmatpush.msra.mxu0 %v821
        %977 = vmatpush.msra.mxu0 %v820
        %978 = vmatpush.msra.mxu0 %v819
        %979 = vmatpush.msra.mxu0 %v818
        %980 = vmatpush.msra.mxu0 %v817
        %981 = vmatpush.msra.mxu0 %v816
        %982 = vmatpush.msra.mxu0 %v815
        %983 = vmatpush.msra.mxu0 %v814
        %984 = vmatpush.msra.mxu0 %v813
        %985 = vmatpush.msra.mxu0 %v812
        %986 = vmatpush.msra.mxu0 %v811
        %987 = vmatpush.msra.mxu0 %v810
        %988 = vmatpush.msra.mxu0 %v809
        %989 = vmatpush.msra.mxu0 %v808
        %990 = vmatpush.msra.mxu0 %v807
        %991 = vmatpush.msra.mxu0 %v806
        %992 = vmatmul.f32.gmra.mxu0 %v700
        %v993 = vpop.f32.mrf.mxu0
        %v994 = vadd.f32 %v971, %v993
        %995 = vmatmul.f32.gmra.mxu0 %v708
        %v996 = vpop.f32.mrf.mxu0
        %v997 = vadd.f32 %v974, %v996
        %998 = vdwg.mxu0
        %999 = vmatpush.msra.mxu0 %v837
        %1000 = vmatpush.msra.mxu0 %v836
        %1001 = vmatpush.msra.mxu0 %v835
        %1002 = vmatpush.msra.mxu0 %v834
        %1003 = vmatpush.msra.mxu0 %v833
        %1004 = vmatpush.msra.mxu0 %v832
        %1005 = vmatpush.msra.mxu0 %v831
        %1006 = vmatpush.msra.mxu0 %v830
        %1007 = vmatpush.msra.mxu0 %v829
        %1008 = vmatpush.msra.mxu0 %v828
        %1009 = vmatpush.msra.mxu0 %v827
        %1010 = vmatpush.msra.mxu0 %v826
        %1011 = vmatpush.msra.mxu0 %v825
        %1012 = vmatpush.msra.mxu0 %v824
        %1013 = vmatpush.msra.mxu0 %v823
        %1014 = vmatpush.msra.mxu0 %v822
        %1015 = vmatmul.f32.gmra.mxu0 %v701
        %v1016 = vpop.f32.mrf.mxu0
        %v1017 = vadd.f32 %v994, %v1016
        %1018 = vmatmul.f32.gmra.mxu0 %v709
        %v1019 = vpop.f32.mrf.mxu0
        %v1020 = vadd.f32 %v997, %v1019
        %1021 = vdwg.mxu0
        %v1022 = vmul.f32 %v1017, 0.03125
        %v1023 = vmul.f32 %v1020, 0.03125
        %v1024 = vld [vmem:[%s4] sm:$0xff]
        %v1025 = vld [vmem:[%s4 + $0x8] sm:$0xff]
        %v1026 = vld [vmem:[%s4 + $0x10] sm:$0xff]
        %v1027 = vld [vmem:[%s4 + $0x18] sm:$0xff]
        %v1028 = vld [vmem:[%s4 + $0x20] sm:$0xff]
        %v1029 = vld [vmem:[%s4 + $0x28] sm:$0xff]
        %v1030 = vld [vmem:[%s4 + $0x30] sm:$0xff]
        %v1031 = vld [vmem:[%s4 + $0x38] sm:$0xff]
        %v1032 = vld [vmem:[%s4 + $0x40] sm:$0xff]
        %v1033 = vld [vmem:[%s4 + $0x48] sm:$0xff]
        %v1034 = vld [vmem:[%s4 + $0x50] sm:$0xff]
        %v1035 = vld [vmem:[%s4 + $0x58] sm:$0xff]
        %v1036 = vld [vmem:[%s4 + $0x60] sm:$0xff]
        %v1037 = vld [vmem:[%s4 + $0x68] sm:$0xff]
        %v1038 = vld [vmem:[%s4 + $0x70] sm:$0xff]
        %v1039 = vld [vmem:[%s4 + $0x78] sm:$0xff]
        %v1040 = vld [vmem:[%s4 + $0x80] sm:$0xff]
        %v1041 = vld [vmem:[%s4 + $0x88] sm:$0xff]
        %v1042 = vld [vmem:[%s4 + $0x90] sm:$0xff]
        %v1043 = vld [vmem:[%s4 + $0x98] sm:$0xff]
        %v1044 = vld [vmem:[%s4 + $0xa0] sm:$0xff]
        %v1045 = vld [vmem:[%s4 + $0xa8] sm:$0xff]
        %v1046 = vld [vmem:[%s4 + $0xb0] sm:$0xff]
        %v1047 = vld [vmem:[%s4 + $0xb8] sm:$0xff]
        %v1048 = vld [vmem:[%s4 + $0xc0] sm:$0xff]
        %v1049 = vld [vmem:[%s4 + $0xc8] sm:$0xff]
        %v1050 = vld [vmem:[%s4 + $0xd0] sm:$0xff]
        %v1051 = vld [vmem:[%s4 + $0xd8] sm:$0xff]
        %v1052 = vld [vmem:[%s4 + $0xe0] sm:$0xff]
        %v1053 = vld [vmem:[%s4 + $0xe8] sm:$0xff]
        %v1054 = vld [vmem:[%s4 + $0xf0] sm:$0xff]
        %v1055 = vld [vmem:[%s4 + $0xf8] sm:$0xff]
        %v1057 = vsel %vm498, %v1022, 0
        %v1060 = vsel %vm498, %v1023, 0
        %1062 = vmatpush.msra.mxu0 0.0
        %1063 = vmatpush.msra.mxu0 0.0
        %1064 = vmatpush.msra.mxu0 0.0
        %1065 = vmatpush.msra.mxu0 0.0
        %1066 = vmatpush.msra.mxu0 0.0
        %1067 = vmatpush.msra.mxu0 0.0
        %1068 = vmatpush.msra.mxu0 0.0
        %1069 = vmatpush.msra.mxu0 0.0
        %1070 = vmatpush.msra.mxu0 0.0
        %1071 = vmatpush.msra.mxu0 0.0
        %1072 = vmatpush.msra.mxu0 0.0
        %1073 = vmatpush.msra.mxu0 0.0
        %1074 = vmatpush.msra.mxu0 %v1048
        %1075 = vmatpush.msra.mxu0 %v1040
        %1076 = vmatpush.msra.mxu0 %v1032
        %1077 = vmatpush.msra.mxu0 %v1024
        %1078 = vmatmul.f32.gmra.mxu0 %v1057
        %v1079 = vpop.f32.mrf.mxu0
        %v1080 = vadd.f32 0.0, %v1079
        %1081 = vmatmul.f32.gmra.mxu0 %v1060
        %v1082 = vpop.f32.mrf.mxu0
        %v1083 = vadd.f32 0.0, %v1082
        %1084 = vdwg.mxu0
        %1085 = vmatpush.msra.mxu0 0.0
        %1086 = vmatpush.msra.mxu0 0.0
        %1087 = vmatpush.msra.mxu0 0.0
        %1088 = vmatpush.msra.mxu0 0.0
        %1089 = vmatpush.msra.mxu0 0.0
        %1090 = vmatpush.msra.mxu0 0.0
        %1091 = vmatpush.msra.mxu0 0.0
        %1092 = vmatpush.msra.mxu0 0.0
        %1093 = vmatpush.msra.mxu0 0.0
        %1094 = vmatpush.msra.mxu0 0.0
        %1095 = vmatpush.msra.mxu0 0.0
        %1096 = vmatpush.msra.mxu0 0.0
        %1097 = vmatpush.msra.mxu0 %v1049
        %1098 = vmatpush.msra.mxu0 %v1041
        %1099 = vmatpush.msra.mxu0 %v1033
        %1100 = vmatpush.msra.mxu0 %v1025
        %1101 = vmatmul.f32.gmra.mxu0 %v1057
        %v1102 = vpop.f32.mrf.mxu0
        %v1103 = vadd.f32 0.0, %v1102
        %1104 = vmatmul.f32.gmra.mxu0 %v1060
        %v1105 = vpop.f32.mrf.mxu0
        %v1106 = vadd.f32 0.0, %v1105
        %1107 = vdwg.mxu0
        %1108 = vmatpush.msra.mxu0 0.0
        %1109 = vmatpush.msra.mxu0 0.0
        %1110 = vmatpush.msra.mxu0 0.0
        %1111 = vmatpush.msra.mxu0 0.0
        %1112 = vmatpush.msra.mxu0 0.0
        %1113 = vmatpush.msra.mxu0 0.0
        %1114 = vmatpush.msra.mxu0 0.0
        %1115 = vmatpush.msra.mxu0 0.0
        %1116 = vmatpush.msra.mxu0 0.0
        %1117 = vmatpush.msra.mxu0 0.0
        %1118 = vmatpush.msra.mxu0 0.0
        %1119 = vmatpush.msra.mxu0 0.0
        %1120 = vmatpush.msra.mxu0 %v1050
        %1121 = vmatpush.msra.mxu0 %v1042
        %1122 = vmatpush.msra.mxu0 %v1034
        %1123 = vmatpush.msra.mxu0 %v1026
        %1124 = vmatmul.f32.gmra.mxu0 %v1057
        %v1125 = vpop.f32.mrf.mxu0
        %v1126 = vadd.f32 0.0, %v1125
        %1127 = vmatmul.f32.gmra.mxu0 %v1060
        %v1128 = vpop.f32.mrf.mxu0
        %v1129 = vadd.f32 0.0, %v1128
        %1130 = vdwg.mxu0
        %1131 = vmatpush.msra.mxu0 0.0
        %1132 = vmatpush.msra.mxu0 0.0
        %1133 = vmatpush.msra.mxu0 0.0
        %1134 = vmatpush.msra.mxu0 0.0
        %1135 = vmatpush.msra.mxu0 0.0
        %1136 = vmatpush.msra.mxu0 0.0
        %1137 = vmatpush.msra.mxu0 0.0
        %1138 = vmatpush.msra.mxu0 0.0
        %1139 = vmatpush.msra.mxu0 0.0
        %1140 = vmatpush.msra.mxu0 0.0
        %1141 = vmatpush.msra.mxu0 0.0
        %1142 = vmatpush.msra.mxu0 0.0
        %1143 = vmatpush.msra.mxu0 %v1051
        %1144 = vmatpush.msra.mxu0 %v1043
        %1145 = vmatpush.msra.mxu0 %v1035
        %1146 = vmatpush.msra.mxu0 %v1027
        %1147 = vmatmul.f32.gmra.mxu0 %v1057
        %v1148 = vpop.f32.mrf.mxu0
        %v1149 = vadd.f32 0.0, %v1148
        %1150 = vmatmul.f32.gmra.mxu0 %v1060
        %v1151 = vpop.f32.mrf.mxu0
        %v1152 = vadd.f32 0.0, %v1151
        %1153 = vdwg.mxu0
        %1154 = vmatpush.msra.mxu0 0.0
        %1155 = vmatpush.msra.mxu0 0.0
        %1156 = vmatpush.msra.mxu0 0.0
        %1157 = vmatpush.msra.mxu0 0.0
        %1158 = vmatpush.msra.mxu0 0.0
        %1159 = vmatpush.msra.mxu0 0.0
        %1160 = vmatpush.msra.mxu0 0.0
        %1161 = vmatpush.msra.mxu0 0.0
        %1162 = vmatpush.msra.mxu0 0.0
        %1163 = vmatpush.msra.mxu0 0.0
        %1164 = vmatpush.msra.mxu0 0.0
        %1165 = vmatpush.msra.mxu0 0.0
        %1166 = vmatpush.msra.mxu0 %v1052
        %1167 = vmatpush.msra.mxu0 %v1044
        %1168 = vmatpush.msra.mxu0 %v1036
        %1169 = vmatpush.msra.mxu0 %v1028
        %1170 = vmatmul.f32.gmra.mxu0 %v1057
        %v1171 = vpop.f32.mrf.mxu0
        %v1172 = vadd.f32 0.0, %v1171
        %1173 = vmatmul.f32.gmra.mxu0 %v1060
        %v1174 = vpop.f32.mrf.mxu0
        %v1175 = vadd.f32 0.0, %v1174
        %1176 = vdwg.mxu0
        %1177 = vmatpush.msra.mxu0 0.0
        %1178 = vmatpush.msra.mxu0 0.0
        %1179 = vmatpush.msra.mxu0 0.0
        %1180 = vmatpush.msra.mxu0 0.0
        %1181 = vmatpush.msra.mxu0 0.0
        %1182 = vmatpush.msra.mxu0 0.0
        %1183 = vmatpush.msra.mxu0 0.0
        %1184 = vmatpush.msra.mxu0 0.0
        %1185 = vmatpush.msra.mxu0 0.0
        %1186 = vmatpush.msra.mxu0 0.0
        %1187 = vmatpush.msra.mxu0 0.0
        %1188 = vmatpush.msra.mxu0 0.0
        %1189 = vmatpush.msra.mxu0 %v1053
        %1190 = vmatpush.msra.mxu0 %v1045
        %1191 = vmatpush.msra.mxu0 %v1037
        %1192 = vmatpush.msra.mxu0 %v1029
        %1193 = vmatmul.f32.gmra.mxu0 %v1057
        %v1194 = vpop.f32.mrf.mxu0
        %v1195 = vadd.f32 0.0, %v1194
        %1196 = vmatmul.f32.gmra.mxu0 %v1060
        %v1197 = vpop.f32.mrf.mxu0
        %v1198 = vadd.f32 0.0, %v1197
        %1199 = vdwg.mxu0
        %1200 = vmatpush.msra.mxu0 0.0
        %1201 = vmatpush.msra.mxu0 0.0
        %1202 = vmatpush.msra.mxu0 0.0
        %1203 = vmatpush.msra.mxu0 0.0
        %1204 = vmatpush.msra.mxu0 0.0
        %1205 = vmatpush.msra.mxu0 0.0
        %1206 = vmatpush.msra.mxu0 0.0
        %1207 = vmatpush.msra.mxu0 0.0
        %1208 = vmatpush.msra.mxu0 0.0
        %1209 = vmatpush.msra.mxu0 0.0
        %1210 = vmatpush.msra.mxu0 0.0
        %1211 = vmatpush.msra.mxu0 0.0
        %1212 = vmatpush.msra.mxu0 %v1054
        %1213 = vmatpush.msra.mxu0 %v1046
        %1214 = vmatpush.msra.mxu0 %v1038
        %1215 = vmatpush.msra.mxu0 %v1030
        %1216 = vmatmul.f32.gmra.mxu0 %v1057
        %v1217 = vpop.f32.mrf.mxu0
        %v1218 = vadd.f32 0.0, %v1217
        %1219 = vmatmul.f32.gmra.mxu0 %v1060
        %v1220 = vpop.f32.mrf.mxu0
        %v1221 = vadd.f32 0.0, %v1220
        %1222 = vdwg.mxu0
        %1223 = vmatpush.msra.mxu0 0.0
        %1224 = vmatpush.msra.mxu0 0.0
        %1225 = vmatpush.msra.mxu0 0.0
        %1226 = vmatpush.msra.mxu0 0.0
        %1227 = vmatpush.msra.mxu0 0.0
        %1228 = vmatpush.msra.mxu0 0.0
        %1229 = vmatpush.msra.mxu0 0.0
        %1230 = vmatpush.msra.mxu0 0.0
        %1231 = vmatpush.msra.mxu0 0.0
        %1232 = vmatpush.msra.mxu0 0.0
        %1233 = vmatpush.msra.mxu0 0.0
        %1234 = vmatpush.msra.mxu0 0.0
        %1235 = vmatpush.msra.mxu0 %v1055
        %1236 = vmatpush.msra.mxu0 %v1047
        %1237 = vmatpush.msra.mxu0 %v1039
        %1238 = vmatpush.msra.mxu0 %v1031
        %1239 = vmatmul.f32.gmra.mxu0 %v1057
        %v1240 = vpop.f32.mrf.mxu0
        %v1241 = vadd.f32 0.0, %v1240
        %1242 = vmatmul.f32.gmra.mxu0 %v1060
        %v1243 = vpop.f32.mrf.mxu0
        %v1244 = vadd.f32 0.0, %v1243
        %1245 = vdwg.mxu0
        %v1246 = vsub.f32 %v694, %v1080
        %v1247 = vsub.f32 %v695, %v1103
        %v1248 = vsub.f32 %v696, %v1126
        %v1249 = vsub.f32 %v697, %v1149
        %v1250 = vsub.f32 %v698, %v1172
        %v1251 = vsub.f32 %v699, %v1195
        %v1252 = vsub.f32 %v700, %v1218
        %v1253 = vsub.f32 %v701, %v1241
        %v1254 = vsub.f32 %v702, %v1083
        %v1255 = vsub.f32 %v703, %v1106
        %v1256 = vsub.f32 %v704, %v1129
        %v1257 = vsub.f32 %v705, %v1152
        %v1258 = vsub.f32 %v706, %v1175
        %v1259 = vsub.f32 %v707, %v1198
        %v1260 = vsub.f32 %v708, %v1221
        %v1261 = vsub.f32 %v709, %v1244
        %v1262 = vmul.f32 %v1246, %v1246
        %v1263 = vmul.f32 %v1247, %v1247
        %v1264 = vmul.f32 %v1248, %v1248
        %v1265 = vmul.f32 %v1249, %v1249
        %v1266 = vmul.f32 %v1250, %v1250
        %v1267 = vmul.f32 %v1251, %v1251
        %v1268 = vmul.f32 %v1252, %v1252
        %v1269 = vmul.f32 %v1253, %v1253
        %v1270 = vmul.f32 %v1254, %v1254
        %v1271 = vmul.f32 %v1255, %v1255
        %v1272 = vmul.f32 %v1256, %v1256
        %v1273 = vmul.f32 %v1257, %v1257
        %v1274 = vmul.f32 %v1258, %v1258
        %v1275 = vmul.f32 %v1259, %v1259
        %v1276 = vmul.f32 %v1260, %v1260
        %v1277 = vmul.f32 %v1261, %v1261
        %1278 = vmatpush.msra.mxu0 %v725
        %1279 = vmatpush.msra.mxu0 %v724
        %1280 = vmatpush.msra.mxu0 %v723
        %1281 = vmatpush.msra.mxu0 %v722
        %1282 = vmatpush.msra.mxu0 %v721
        %1283 = vmatpush.msra.mxu0 %v720
        %1284 = vmatpush.msra.mxu0 %v719
        %1285 = vmatpush.msra.mxu0 %v718
        %1286 = vmatpush.msra.mxu0 %v717
        %1287 = vmatpush.msra.mxu0 %v716
        %1288 = vmatpush.msra.mxu0 %v715
        %1289 = vmatpush.msra.mxu0 %v714
        %1290 = vmatpush.msra.mxu0 %v713
        %1291 = vmatpush.msra.mxu0 %v712
        %1292 = vmatpush.msra.mxu0 %v711
        %1293 = vmatpush.msra.mxu0 %v710
        %1294 = vmatmul.f32.gmra.mxu0 %v1262
        %v1295 = vpop.f32.mrf.mxu0
        %v1296 = vadd.f32 0.0, %v1295
        %1297 = vmatmul.f32.gmra.mxu0 %v1270
        %v1298 = vpop.f32.mrf.mxu0
        %v1299 = vadd.f32 0.0, %v1298
        %1300 = vdwg.mxu0
        %1301 = vmatpush.msra.mxu0 %v741
        %1302 = vmatpush.msra.mxu0 %v740
        %1303 = vmatpush.msra.mxu0 %v739
        %1304 = vmatpush.msra.mxu0 %v738
        %1305 = vmatpush.msra.mxu0 %v737
        %1306 = vmatpush.msra.mxu0 %v736
        %1307 = vmatpush.msra.mxu0 %v735
        %1308 = vmatpush.msra.mxu0 %v734
        %1309 = vmatpush.msra.mxu0 %v733
        %1310 = vmatpush.msra.mxu0 %v732
        %1311 = vmatpush.msra.mxu0 %v731
        %1312 = vmatpush.msra.mxu0 %v730
        %1313 = vmatpush.msra.mxu0 %v729
        %1314 = vmatpush.msra.mxu0 %v728
        %1315 = vmatpush.msra.mxu0 %v727
        %1316 = vmatpush.msra.mxu0 %v726
        %1317 = vmatmul.f32.gmra.mxu0 %v1263
        %v1318 = vpop.f32.mrf.mxu0
        %v1319 = vadd.f32 %v1296, %v1318
        %1320 = vmatmul.f32.gmra.mxu0 %v1271
        %v1321 = vpop.f32.mrf.mxu0
        %v1322 = vadd.f32 %v1299, %v1321
        %1323 = vdwg.mxu0
        %1324 = vmatpush.msra.mxu0 %v757
        %1325 = vmatpush.msra.mxu0 %v756
        %1326 = vmatpush.msra.mxu0 %v755
        %1327 = vmatpush.msra.mxu0 %v754
        %1328 = vmatpush.msra.mxu0 %v753
        %1329 = vmatpush.msra.mxu0 %v752
        %1330 = vmatpush.msra.mxu0 %v751
        %1331 = vmatpush.msra.mxu0 %v750
        %1332 = vmatpush.msra.mxu0 %v749
        %1333 = vmatpush.msra.mxu0 %v748
        %1334 = vmatpush.msra.mxu0 %v747
        %1335 = vmatpush.msra.mxu0 %v746
        %1336 = vmatpush.msra.mxu0 %v745
        %1337 = vmatpush.msra.mxu0 %v744
        %1338 = vmatpush.msra.mxu0 %v743
        %1339 = vmatpush.msra.mxu0 %v742
        %1340 = vmatmul.f32.gmra.mxu0 %v1264
        %v1341 = vpop.f32.mrf.mxu0
        %v1342 = vadd.f32 %v1319, %v1341
        %1343 = vmatmul.f32.gmra.mxu0 %v1272
        %v1344 = vpop.f32.mrf.mxu0
        %v1345 = vadd.f32 %v1322, %v1344
        %1346 = vdwg.mxu0
        %1347 = vmatpush.msra.mxu0 %v773
        %1348 = vmatpush.msra.mxu0 %v772
        %1349 = vmatpush.msra.mxu0 %v771
        %1350 = vmatpush.msra.mxu0 %v770
        %1351 = vmatpush.msra.mxu0 %v769
        %1352 = vmatpush.msra.mxu0 %v768
        %1353 = vmatpush.msra.mxu0 %v767
        %1354 = vmatpush.msra.mxu0 %v766
        %1355 = vmatpush.msra.mxu0 %v765
        %1356 = vmatpush.msra.mxu0 %v764
        %1357 = vmatpush.msra.mxu0 %v763
        %1358 = vmatpush.msra.mxu0 %v762
        %1359 = vmatpush.msra.mxu0 %v761
        %1360 = vmatpush.msra.mxu0 %v760
        %1361 = vmatpush.msra.mxu0 %v759
        %1362 = vmatpush.msra.mxu0 %v758
        %1363 = vmatmul.f32.gmra.mxu0 %v1265
        %v1364 = vpop.f32.mrf.mxu0
        %v1365 = vadd.f32 %v1342, %v1364
        %1366 = vmatmul.f32.gmra.mxu0 %v1273
        %v1367 = vpop.f32.mrf.mxu0
        %v1368 = vadd.f32 %v1345, %v1367
        %1369 = vdwg.mxu0
        %1370 = vmatpush.msra.mxu0 %v789
        %1371 = vmatpush.msra.mxu0 %v788
        %1372 = vmatpush.msra.mxu0 %v787
        %1373 = vmatpush.msra.mxu0 %v786
        %1374 = vmatpush.msra.mxu0 %v785
        %1375 = vmatpush.msra.mxu0 %v784
        %1376 = vmatpush.msra.mxu0 %v783
        %1377 = vmatpush.msra.mxu0 %v782
        %1378 = vmatpush.msra.mxu0 %v781
        %1379 = vmatpush.msra.mxu0 %v780
        %1380 = vmatpush.msra.mxu0 %v779
        %1381 = vmatpush.msra.mxu0 %v778
        %1382 = vmatpush.msra.mxu0 %v777
        %1383 = vmatpush.msra.mxu0 %v776
        %1384 = vmatpush.msra.mxu0 %v775
        %1385 = vmatpush.msra.mxu0 %v774
        %1386 = vmatmul.f32.gmra.mxu0 %v1266
        %v1387 = vpop.f32.mrf.mxu0
        %v1388 = vadd.f32 %v1365, %v1387
        %1389 = vmatmul.f32.gmra.mxu0 %v1274
        %v1390 = vpop.f32.mrf.mxu0
        %v1391 = vadd.f32 %v1368, %v1390
        %1392 = vdwg.mxu0
        %1393 = vmatpush.msra.mxu0 %v805
        %1394 = vmatpush.msra.mxu0 %v804
        %1395 = vmatpush.msra.mxu0 %v803
        %1396 = vmatpush.msra.mxu0 %v802
        %1397 = vmatpush.msra.mxu0 %v801
        %1398 = vmatpush.msra.mxu0 %v800
        %1399 = vmatpush.msra.mxu0 %v799
        %1400 = vmatpush.msra.mxu0 %v798
        %1401 = vmatpush.msra.mxu0 %v797
        %1402 = vmatpush.msra.mxu0 %v796
        %1403 = vmatpush.msra.mxu0 %v795
        %1404 = vmatpush.msra.mxu0 %v794
        %1405 = vmatpush.msra.mxu0 %v793
        %1406 = vmatpush.msra.mxu0 %v792
        %1407 = vmatpush.msra.mxu0 %v791
        %1408 = vmatpush.msra.mxu0 %v790
        %1409 = vmatmul.f32.gmra.mxu0 %v1267
        %v1410 = vpop.f32.mrf.mxu0
        %v1411 = vadd.f32 %v1388, %v1410
        %1412 = vmatmul.f32.gmra.mxu0 %v1275
        %v1413 = vpop.f32.mrf.mxu0
        %v1414 = vadd.f32 %v1391, %v1413
        %1415 = vdwg.mxu0
        %1416 = vmatpush.msra.mxu0 %v821
        %1417 = vmatpush.msra.mxu0 %v820
        %1418 = vmatpush.msra.mxu0 %v819
        %1419 = vmatpush.msra.mxu0 %v818
        %1420 = vmatpush.msra.mxu0 %v817
        %1421 = vmatpush.msra.mxu0 %v816
        %1422 = vmatpush.msra.mxu0 %v815
        %1423 = vmatpush.msra.mxu0 %v814
        %1424 = vmatpush.msra.mxu0 %v813
        %1425 = vmatpush.msra.mxu0 %v812
        %1426 = vmatpush.msra.mxu0 %v811
        %1427 = vmatpush.msra.mxu0 %v810
        %1428 = vmatpush.msra.mxu0 %v809
        %1429 = vmatpush.msra.mxu0 %v808
        %1430 = vmatpush.msra.mxu0 %v807
        %1431 = vmatpush.msra.mxu0 %v806
        %1432 = vmatmul.f32.gmra.mxu0 %v1268
        %v1433 = vpop.f32.mrf.mxu0
        %v1434 = vadd.f32 %v1411, %v1433
        %1435 = vmatmul.f32.gmra.mxu0 %v1276
        %v1436 = vpop.f32.mrf.mxu0
        %v1437 = vadd.f32 %v1414, %v1436
        %1438 = vdwg.mxu0
        %1439 = vmatpush.msra.mxu0 %v837
        %1440 = vmatpush.msra.mxu0 %v836
        %1441 = vmatpush.msra.mxu0 %v835
        %1442 = vmatpush.msra.mxu0 %v834
        %1443 = vmatpush.msra.mxu0 %v833
        %1444 = vmatpush.msra.mxu0 %v832
        %1445 = vmatpush.msra.mxu0 %v831
        %1446 = vmatpush.msra.mxu0 %v830
        %1447 = vmatpush.msra.mxu0 %v829
        %1448 = vmatpush.msra.mxu0 %v828
        %1449 = vmatpush.msra.mxu0 %v827
        %1450 = vmatpush.msra.mxu0 %v826
        %1451 = vmatpush.msra.mxu0 %v825
        %1452 = vmatpush.msra.mxu0 %v824
        %1453 = vmatpush.msra.mxu0 %v823
        %1454 = vmatpush.msra.mxu0 %v822
        %1455 = vmatmul.f32.gmra.mxu0 %v1269
        %v1456 = vpop.f32.mrf.mxu0
        %v1457 = vadd.f32 %v1434, %v1456
        %1458 = vmatmul.f32.gmra.mxu0 %v1277
        %v1459 = vpop.f32.mrf.mxu0
        %v1460 = vadd.f32 %v1437, %v1459
        %1461 = vdwg.mxu0
        %v1462 = vmul.f32 %v1457, 0.032258064
        %v1463 = vmul.f32 %v1460, 0.032258064
        %v1464 = vmax.f32 %v1462, 1e-06
        %v1465 = vmax.f32 %v1463, 1e-06
        %v1466 = vmin.f32 %v1464, 1000000.0
        %v1467 = vmin.f32 %v1465, 1000000.0
        %v1468 = vlog2.pop %v1466
        %v1469 = vmul.f32 %v1468, 0.6931472
        %v1470 = vlog2.pop %v1467
        %v1471 = vmul.f32 %v1470, 0.6931472
        %v1472 = vld [vmem:[%s5] sm:$0xff]
        %v1473 = vld [vmem:[%s5 + $0x8] sm:$0xff]
        %v1474 = vmul.f32 %v1469, %v1472
        %v1475 = vmul.f32 %v1471, %v1473
        %v1476 = vld [vmem:[%s6] sm:$0xff]
        %v1477 = vld [vmem:[%s6 + $0x8] sm:$0xff]
        %v1478 = vld [vmem:[%s6 + $0x10] sm:$0xff]
        %v1479 = vld [vmem:[%s6 + $0x18] sm:$0xff]
        %v1481 = vsel %vm498, %v1474, 0
        %v1484 = vsel %vm498, %v1475, 0
        %1486 = vmatpush.msra.mxu0 0.0
        %1487 = vmatpush.msra.mxu0 0.0
        %1488 = vmatpush.msra.mxu0 0.0
        %1489 = vmatpush.msra.mxu0 0.0
        %1490 = vmatpush.msra.mxu0 0.0
        %1491 = vmatpush.msra.mxu0 0.0
        %1492 = vmatpush.msra.mxu0 0.0
        %1493 = vmatpush.msra.mxu0 0.0
        %1494 = vmatpush.msra.mxu0 0.0
        %1495 = vmatpush.msra.mxu0 0.0
        %1496 = vmatpush.msra.mxu0 0.0
        %1497 = vmatpush.msra.mxu0 0.0
        %1498 = vmatpush.msra.mxu0 %v1479
        %1499 = vmatpush.msra.mxu0 %v1478
        %1500 = vmatpush.msra.mxu0 %v1477
        %1501 = vmatpush.msra.mxu0 %v1476
        %1502 = vmatmul.f32.gmra.mxu0 %v1481
        %v1503 = vpop.f32.mrf.mxu0
        %v1504 = vadd.f32 0.0, %v1503
        %1505 = vmatmul.f32.gmra.mxu0 %v1484
        %v1506 = vpop.f32.mrf.mxu0
        %v1507 = vadd.f32 0.0, %v1506
        %1508 = vdwg.mxu0
        %v1509 = vld [vmem:[%s7] sm:$0xff]
        %v1510 = vld [vmem:[%s7 + $0x8] sm:$0xff]
        %v1511 = vld [vmem:[%s8] sm:$0x1]
        %1513 = vset.pattern.permute.xlu0 0
        %1514 = vperm.xlu0 %1513, %v1504
        %v1515 = vpop.permute.xlu0 %1514
        %1518 = vset.pattern.permute.xlu0 0
        %1519 = vperm.xlu0 %1518, %v1507
        %v1520 = vpop.permute.xlu0 %1519
        %v1522 = vmul.f32 %v1515, %v1509
        %v1523 = vmul.f32 %v1520, %v1510
        %v1524 = vadd.f32 %v1522, %v1523
        %v1525 = vrot.slane %v1524, 4
        %v1526 = vadd.f32 %v1524, %v1525
        %v1527 = vrot.slane %v1526, 2
        %v1528 = vadd.f32 %v1526, %v1527
        %v1529 = vrot.slane %v1528, 1
        %v1530 = vadd.f32 %v1528, %v1529
        %v1531 = vadd.f32 %v1530, %v1511
        %vm1532 = vcmask 1040384
        %v1533 = vsel %vm1532, %v1531, -inf
        %1534 = vmax.xlane.f32.xlu0 %v1533
        %v1535 = vpop.xlane.xlu0 %1534
        %v1536 = vsub.f32 %v1531, %v1535
        %v1537 = vmul.f32 %v1536, 1.442695
        %v1538 = vpow.pop %v1537
        %v1539 = vsel %vm1532, %v1538, 0.0
        %1540 = vadd.xlane.f32.xlu0 %v1539
        %v1541 = vpop.xlane.xlu0 %1540
        %v1542 = vlog2.pop %v1541
        %v1543 = vmul.f32 %v1542, 0.6931472
        %v1544 = vadd.f32 %v1535, %v1543
        %v1545 = vsub.f32 %v1531, %v1544
        %1546 = vst [vmem:[%s380] sm:$0x1] %v1545
        %1547 = vset.pattern.permute.xlu0 1
        %1548 = vperm.xlu0 %1547, %v1504
        %v1549 = vpop.permute.xlu0 %1548
        %1551 = vset.pattern.permute.xlu0 1
        %1552 = vperm.xlu0 %1551, %v1507
        %v1553 = vpop.permute.xlu0 %1552
        %v1555 = vmul.f32 %v1549, %v1509
        %v1556 = vmul.f32 %v1553, %v1510
        %v1557 = vadd.f32 %v1555, %v1556
        %v1558 = vrot.slane %v1557, 4
        %v1559 = vadd.f32 %v1557, %v1558
        %v1560 = vrot.slane %v1559, 2
        %v1561 = vadd.f32 %v1559, %v1560
        %v1562 = vrot.slane %v1561, 1
        %v1563 = vadd.f32 %v1561, %v1562
        %v1564 = vadd.f32 %v1563, %v1511
        %v1565 = vsel %vm1532, %v1564, -inf
        %1566 = vmax.xlane.f32.xlu0 %v1565
        %v1567 = vpop.xlane.xlu0 %1566
        %v1568 = vsub.f32 %v1564, %v1567
        %v1569 = vmul.f32 %v1568, 1.442695
        %v1570 = vpow.pop %v1569
        %v1571 = vsel %vm1532, %v1570, 0.0
        %1572 = vadd.xlane.f32.xlu0 %v1571
        %v1573 = vpop.xlane.xlu0 %1572
        %v1574 = vlog2.pop %v1573
        %v1575 = vmul.f32 %v1574, 0.6931472
        %v1576 = vadd.f32 %v1567, %v1575
        %v1577 = vsub.f32 %v1564, %v1576
        %1578 = vst [vmem:[%s380 + $0x1] sm:$0x1] %v1577
        %1579 = vset.pattern.permute.xlu0 2
        %1580 = vperm.xlu0 %1579, %v1504
        %v1581 = vpop.permute.xlu0 %1580
        %1583 = vset.pattern.permute.xlu0 2
        %1584 = vperm.xlu0 %1583, %v1507
        %v1585 = vpop.permute.xlu0 %1584
        %v1587 = vmul.f32 %v1581, %v1509
        %v1588 = vmul.f32 %v1585, %v1510
        %v1589 = vadd.f32 %v1587, %v1588
        %v1590 = vrot.slane %v1589, 4
        %v1591 = vadd.f32 %v1589, %v1590
        %v1592 = vrot.slane %v1591, 2
        %v1593 = vadd.f32 %v1591, %v1592
        %v1594 = vrot.slane %v1593, 1
        %v1595 = vadd.f32 %v1593, %v1594
        %v1596 = vadd.f32 %v1595, %v1511
        %v1597 = vsel %vm1532, %v1596, -inf
        %1598 = vmax.xlane.f32.xlu0 %v1597
        %v1599 = vpop.xlane.xlu0 %1598
        %v1600 = vsub.f32 %v1596, %v1599
        %v1601 = vmul.f32 %v1600, 1.442695
        %v1602 = vpow.pop %v1601
        %v1603 = vsel %vm1532, %v1602, 0.0
        %1604 = vadd.xlane.f32.xlu0 %v1603
        %v1605 = vpop.xlane.xlu0 %1604
        %v1606 = vlog2.pop %v1605
        %v1607 = vmul.f32 %v1606, 0.6931472
        %v1608 = vadd.f32 %v1599, %v1607
        %v1609 = vsub.f32 %v1596, %v1608
        %1610 = vst [vmem:[%s380 + $0x2] sm:$0x1] %v1609
        %1611 = vset.pattern.permute.xlu0 3
        %1612 = vperm.xlu0 %1611, %v1504
        %v1613 = vpop.permute.xlu0 %1612
        %1615 = vset.pattern.permute.xlu0 3
        %1616 = vperm.xlu0 %1615, %v1507
        %v1617 = vpop.permute.xlu0 %1616
        %v1619 = vmul.f32 %v1613, %v1509
        %v1620 = vmul.f32 %v1617, %v1510
        %v1621 = vadd.f32 %v1619, %v1620
        %v1622 = vrot.slane %v1621, 4
        %v1623 = vadd.f32 %v1621, %v1622
        %v1624 = vrot.slane %v1623, 2
        %v1625 = vadd.f32 %v1623, %v1624
        %v1626 = vrot.slane %v1625, 1
        %v1627 = vadd.f32 %v1625, %v1626
        %v1628 = vadd.f32 %v1627, %v1511
        %v1629 = vsel %vm1532, %v1628, -inf
        %1630 = vmax.xlane.f32.xlu0 %v1629
        %v1631 = vpop.xlane.xlu0 %1630
        %v1632 = vsub.f32 %v1628, %v1631
        %v1633 = vmul.f32 %v1632, 1.442695
        %v1634 = vpow.pop %v1633
        %v1635 = vsel %vm1532, %v1634, 0.0
        %1636 = vadd.xlane.f32.xlu0 %v1635
        %v1637 = vpop.xlane.xlu0 %1636
        %v1638 = vlog2.pop %v1637
        %v1639 = vmul.f32 %v1638, 0.6931472
        %v1640 = vadd.f32 %v1631, %v1639
        %v1641 = vsub.f32 %v1628, %v1640
        %1642 = vst [vmem:[%s380 + $0x3] sm:$0x1] %v1641
        %1643 = vset.pattern.permute.xlu0 4
        %1644 = vperm.xlu0 %1643, %v1504
        %v1645 = vpop.permute.xlu0 %1644
        %1647 = vset.pattern.permute.xlu0 4
        %1648 = vperm.xlu0 %1647, %v1507
        %v1649 = vpop.permute.xlu0 %1648
        %v1651 = vmul.f32 %v1645, %v1509
        %v1652 = vmul.f32 %v1649, %v1510
        %v1653 = vadd.f32 %v1651, %v1652
        %v1654 = vrot.slane %v1653, 4
        %v1655 = vadd.f32 %v1653, %v1654
        %v1656 = vrot.slane %v1655, 2
        %v1657 = vadd.f32 %v1655, %v1656
        %v1658 = vrot.slane %v1657, 1
        %v1659 = vadd.f32 %v1657, %v1658
        %v1660 = vadd.f32 %v1659, %v1511
        %v1661 = vsel %vm1532, %v1660, -inf
        %1662 = vmax.xlane.f32.xlu0 %v1661
        %v1663 = vpop.xlane.xlu0 %1662
        %v1664 = vsub.f32 %v1660, %v1663
        %v1665 = vmul.f32 %v1664, 1.442695
        %v1666 = vpow.pop %v1665
        %v1667 = vsel %vm1532, %v1666, 0.0
        %1668 = vadd.xlane.f32.xlu0 %v1667
        %v1669 = vpop.xlane.xlu0 %1668
        %v1670 = vlog2.pop %v1669
        %v1671 = vmul.f32 %v1670, 0.6931472
        %v1672 = vadd.f32 %v1663, %v1671
        %v1673 = vsub.f32 %v1660, %v1672
        %1674 = vst [vmem:[%s380 + $0x4] sm:$0x1] %v1673
        %1675 = vset.pattern.permute.xlu0 5
        %1676 = vperm.xlu0 %1675, %v1504
        %v1677 = vpop.permute.xlu0 %1676
        %1679 = vset.pattern.permute.xlu0 5
        %1680 = vperm.xlu0 %1679, %v1507
        %v1681 = vpop.permute.xlu0 %1680
        %v1683 = vmul.f32 %v1677, %v1509
        %v1684 = vmul.f32 %v1681, %v1510
        %v1685 = vadd.f32 %v1683, %v1684
        %v1686 = vrot.slane %v1685, 4
        %v1687 = vadd.f32 %v1685, %v1686
        %v1688 = vrot.slane %v1687, 2
        %v1689 = vadd.f32 %v1687, %v1688
        %v1690 = vrot.slane %v1689, 1
        %v1691 = vadd.f32 %v1689, %v1690
        %v1692 = vadd.f32 %v1691, %v1511
        %v1693 = vsel %vm1532, %v1692, -inf
        %1694 = vmax.xlane.f32.xlu0 %v1693
        %v1695 = vpop.xlane.xlu0 %1694
        %v1696 = vsub.f32 %v1692, %v1695
        %v1697 = vmul.f32 %v1696, 1.442695
        %v1698 = vpow.pop %v1697
        %v1699 = vsel %vm1532, %v1698, 0.0
        %1700 = vadd.xlane.f32.xlu0 %v1699
        %v1701 = vpop.xlane.xlu0 %1700
        %v1702 = vlog2.pop %v1701
        %v1703 = vmul.f32 %v1702, 0.6931472
        %v1704 = vadd.f32 %v1695, %v1703
        %v1705 = vsub.f32 %v1692, %v1704
        %1706 = vst [vmem:[%s380 + $0x5] sm:$0x1] %v1705
        %1707 = vset.pattern.permute.xlu0 6
        %1708 = vperm.xlu0 %1707, %v1504
        %v1709 = vpop.permute.xlu0 %1708
        %1711 = vset.pattern.permute.xlu0 6
        %1712 = vperm.xlu0 %1711, %v1507
        %v1713 = vpop.permute.xlu0 %1712
        %v1715 = vmul.f32 %v1709, %v1509
        %v1716 = vmul.f32 %v1713, %v1510
        %v1717 = vadd.f32 %v1715, %v1716
        %v1718 = vrot.slane %v1717, 4
        %v1719 = vadd.f32 %v1717, %v1718
        %v1720 = vrot.slane %v1719, 2
        %v1721 = vadd.f32 %v1719, %v1720
        %v1722 = vrot.slane %v1721, 1
        %v1723 = vadd.f32 %v1721, %v1722
        %v1724 = vadd.f32 %v1723, %v1511
        %v1725 = vsel %vm1532, %v1724, -inf
        %1726 = vmax.xlane.f32.xlu0 %v1725
        %v1727 = vpop.xlane.xlu0 %1726
        %v1728 = vsub.f32 %v1724, %v1727
        %v1729 = vmul.f32 %v1728, 1.442695
        %v1730 = vpow.pop %v1729
        %v1731 = vsel %vm1532, %v1730, 0.0
        %1732 = vadd.xlane.f32.xlu0 %v1731
        %v1733 = vpop.xlane.xlu0 %1732
        %v1734 = vlog2.pop %v1733
        %v1735 = vmul.f32 %v1734, 0.6931472
        %v1736 = vadd.f32 %v1727, %v1735
        %v1737 = vsub.f32 %v1724, %v1736
        %1738 = vst [vmem:[%s380 + $0x6] sm:$0x1] %v1737
        %1739 = vset.pattern.permute.xlu0 7
        %1740 = vperm.xlu0 %1739, %v1504
        %v1741 = vpop.permute.xlu0 %1740
        %1743 = vset.pattern.permute.xlu0 7
        %1744 = vperm.xlu0 %1743, %v1507
        %v1745 = vpop.permute.xlu0 %1744
        %v1747 = vmul.f32 %v1741, %v1509
        %v1748 = vmul.f32 %v1745, %v1510
        %v1749 = vadd.f32 %v1747, %v1748
        %v1750 = vrot.slane %v1749, 4
        %v1751 = vadd.f32 %v1749, %v1750
        %v1752 = vrot.slane %v1751, 2
        %v1753 = vadd.f32 %v1751, %v1752
        %v1754 = vrot.slane %v1753, 1
        %v1755 = vadd.f32 %v1753, %v1754
        %v1756 = vadd.f32 %v1755, %v1511
        %v1757 = vsel %vm1532, %v1756, -inf
        %1758 = vmax.xlane.f32.xlu0 %v1757
        %v1759 = vpop.xlane.xlu0 %1758
        %v1760 = vsub.f32 %v1756, %v1759
        %v1761 = vmul.f32 %v1760, 1.442695
        %v1762 = vpow.pop %v1761
        %v1763 = vsel %vm1532, %v1762, 0.0
        %1764 = vadd.xlane.f32.xlu0 %v1763
        %v1765 = vpop.xlane.xlu0 %1764
        %v1766 = vlog2.pop %v1765
        %v1767 = vmul.f32 %v1766, 0.6931472
        %v1768 = vadd.f32 %v1759, %v1767
        %v1769 = vsub.f32 %v1756, %v1768
        %1770 = vst [vmem:[%s380 + $0x7] sm:$0x1] %v1769
        %s1771 = sand.u32 %s225, 1
        %s1772 = scalar_lea.sflag [#allocation4], %s1771
        %s1773 = sand.u32 %s225, 1
        %s1774 = smul.addr %s1773, 8
        %s1775 = scalar_lea.vmem [#allocation3], %s1774
        // Predicated region
        $region80: #{tpu_custom_call.1} parent=74 // pred_check
          %p1776 = pneg %p235
        $region81: #{tpu_custom_call.1} parent=74 // pred_check_branch
          %1778 = sbr.rel (%p1776) target = $region83
        $region82: #{tpu_custom_call.1} parent=74 // pred_region
          %1780 = vsyncadd %s1772, 0
          %s1781 = smul.addr %s23, 8
          %s1782 = scalar_lea.hbm %s9, %s1781
          %s1784 = sshll.u32 %s1775, 4
          %s1785 = int_to_ptr.vmem [resolvable:$true] %s1784
          %s1786 = sshll.u32 %s1782, 4
          %s1787 = int_to_ptr.hbm [resolvable:$true] %s1786
          %1789 = dma.vmem_to_hbm [thread:$0]  %s1785, 128, %s1787, %s1772
        $region83: #{tpu_custom_call.1} parent=74 // pred_fallthru
          _
      $region75: #{tpu_custom_call.1} parent=5 // pred_fallthru
        _
      %p1790 = scmp.le.s32.totalorder 2, %s18
      // Predicated region
      $region84: #{tpu_custom_call.1} parent=5 // pred_check
        %p1791 = pneg %p1790
      $region85: #{tpu_custom_call.1} parent=5 // pred_check_branch
        %1793 = sbr.rel (%p1791) target = $region87
      $region86: #{tpu_custom_call.1} parent=5 // pred_region
        %s1794 = ssub.s32 %s18, 2
        // Predicated region
        $region88: #{tpu_custom_call.1} parent=86 // pred_check
          %p1795 = pneg %p241
        $region89: #{tpu_custom_call.1} parent=86 // pred_check_branch
          %1797 = sbr.rel (%p1795) target = $region91
        $region90: #{tpu_custom_call.1} parent=86 // pred_region
          %s1798 = sand.u32 %s226, 1
          %s1799 = scalar_lea.sflag [#allocation4], %s1798
          %s1800 = sand.u32 %s226, 1
          %s1801 = smul.addr %s1800, 8
          %s1802 = scalar_lea.vmem [#allocation3], %s1801
          %1804 = dma.done %s1799, 128
        $region91: #{tpu_custom_call.1} parent=86 // pred_fallthru
          _
      $region87: #{tpu_custom_call.1} parent=5 // pred_fallthru
        _
    $region6: #{tpu_custom_call.1} parent=1 // loop_footer
      %s22 = sadd.s32 1, %s18
    $region7: #{tpu_custom_call.1} parent=1 // loop_footer_branch
      %17 = sbr.rel target = $region3
    $region8: #{tpu_custom_call.1} parent=1 // loop_exit
      _
    %1805 = vsyncpa [#allocation4], 1
    %s1806 = scalar_lea.sflag [#allocation4], 1
    %1807 = vsyncpa %s1806, 1

</llo_original>
